<compile_context>
chip_gen: v7x
topology: tpu7x:2x2x1
jax: 0.10.0
libtpu: 0.0.40
codegen_flags: <defaults>
</compile_context>

<pallas_src>
import functools
import math

import jax
import jax.numpy as jnp
from jax.experimental import pallas as pl
from jax.experimental.pallas import tpu as pltpu


# ----------------------------------------------------------------------------
# In-kernel helpers
# ----------------------------------------------------------------------------
def _gelu(x):
    # TODO(synk): HF BERT uses exact erf-GELU; tanh approx keeps TPU lowering simple.
    c = math.sqrt(2.0 / math.pi)
    return 0.5 * x * (1.0 + jnp.tanh(c * (x + 0.044715 * x * x * x)))


def _ln(z, g, b, eps):
    mu = jnp.mean(z, axis=-1, keepdims=True)
    var = jnp.mean((z - mu) * (z - mu), axis=-1, keepdims=True)
    return (z - mu) * jax.lax.rsqrt(var + eps) * g + b


def _block_rows(m, target=512):
    """Largest row-tile (multiple of 8, <= target) that divides M."""
    for cand in (target, 256, 128, 64, 32, 16, 8):
        if cand <= m and m % cand == 0:
            return cand
    return m


def _vmem_limit(*nbytes):
    """Scoped-VMEM cap from actual resident bytes (+50% headroom, 32 MiB floor).

    Floor equals the default scoped limit on v6e/v7x; cap kept <= 100 MiB so
    v5e/v6e (128 MiB physical) are safe.  (v7x has 64 MiB physical — at
    BERT-base switch weights to bf16, which this file already does, and/or
    tile the FFN intermediate dim.)
    """
    est = int(sum(int(n) for n in nbytes) * 1.5) + (4 << 20)
    return max(32 << 20, min(est, 100 << 20))


# ----------------------------------------------------------------------------
# Pallas kernels
# ----------------------------------------------------------------------------
def layernorm_kernel(x_ref, g_ref, b_ref, o_ref, *, eps):
    o_ref[...] = _ln(x_ref[...].astype(jnp.float32), g_ref[...], b_ref[...],
                     eps).astype(o_ref.dtype)


def fused_attn_kernel(x_ref, wqkv_ref, bqkv_ref, wo_ref, bo_ref, g_ref, b_ref,
                      m_ref, o_ref, *, num_heads, head_dim, scale, eps):
    """Per-batch block: QKV proj + MHA + out-proj + residual + LayerNorm.

    The (S, 3H) QKV activation, per-head scores and contexts stay in VMEM.
    The output projection is folded into the head loop so head outputs are
    accumulated into one (S, H) f32 slab (no lane concatenate, no narrow
    per-head stores); the final store is a single lane-dense (S, H) write.
    """
    x = x_ref[0]                                        # (S, H) bf16
    H = num_heads * head_dim

    qkv = (jnp.dot(x, wqkv_ref[...], preferred_element_type=jnp.float32)
           + bqkv_ref[...]).astype(x.dtype)             # (S, 3H)
    bias = m_ref[0]                                     # (1, S) additive mask
    wo = wo_ref[...]

    acc = jnp.zeros((x.shape[0], H), jnp.float32)
    # TODO(synk): at BERT-base use a head / q-tile grid axis instead of a
    #             static Python loop (live ranges, v7x megacore sharding).
    for h in range(num_heads):
        lo = h * head_dim
        hi = lo + head_dim
        q_h = qkv[:, lo:hi]
        k_h = qkv[:, H + lo:H + hi]
        v_h = qkv[:, 2 * H + lo:2 * H + hi]
        # contract feature dim directly — no materialized transpose
        s = jax.lax.dot_general(q_h, k_h, (((1,), (1,)), ((), ())),
                                preferred_element_type=jnp.float32)
        s = s * scale + bias
        s = s - jnp.max(s, axis=-1, keepdims=True)
        p = jnp.exp(s)
        p = p * pl.reciprocal(jnp.sum(p, axis=-1, keepdims=True), approx=True)
        ctx = jnp.dot(p.astype(x.dtype), v_h, preferred_element_type=jnp.float32)
        # fold the output projection into the head loop
        acc = acc + jnp.dot(ctx.astype(x.dtype), wo[lo:hi, :],
                            preferred_element_type=jnp.float32)

    z = x.astype(jnp.float32) + acc + bo_ref[...]
    o_ref[0] = _ln(z, g_ref[...], b_ref[...], eps).astype(o_ref.dtype)


def ffn_add_ln_kernel(x_ref, wi_ref, bi_ref, wo_ref, bo_ref, g_ref, b_ref,
                      o_ref, *, eps):
    # LN(x + gelu(x @ wi + bi) @ wo + bo); (bm, I) intermediate stays in VMEM.
    x = x_ref[...]                                      # (bm, H) bf16
    h = jnp.dot(x, wi_ref[...], preferred_element_type=jnp.float32) + bi_ref[...]
    h = _gelu(h).astype(x.dtype)                        # bf16 into the 2nd MXU pass
    y = jnp.dot(h, wo_ref[...], preferred_element_type=jnp.float32) + bo_ref[...]
    z = x.astype(jnp.float32) + y
    o_ref[...] = _ln(z, g_ref[...], b_ref[...], eps).astype(o_ref.dtype)


# ----------------------------------------------------------------------------
# pallas_call wrappers
# ----------------------------------------------------------------------------
def pallas_layernorm(x, gamma, beta, eps, out_dtype=jnp.bfloat16):
    M, H = x.shape
    bm = _block_rows(M)
    kern = functools.partial(layernorm_kernel, eps=eps)
    return pl.pallas_call(
        kern,
        out_shape=jax.ShapeDtypeStruct((M, H), out_dtype),
        grid=(M // bm,),
        in_specs=[pl.BlockSpec((bm, H), lambda i: (i, 0)),
                  pl.BlockSpec((1, H), lambda i: (0, 0)),
                  pl.BlockSpec((1, H), lambda i: (0, 0))],
        out_specs=pl.BlockSpec((bm, H), lambda i: (i, 0)),
        compiler_params=pltpu.CompilerParams(dimension_semantics=("parallel",)),
    )(x, gamma.reshape(1, H), beta.reshape(1, H))


def pallas_fused_attention(x, wqkv, bqkv, wo, bo, gamma, beta, mask_add,
                           scale, num_heads, head_dim, eps):
    B, S, H = x.shape
    kern = functools.partial(fused_attn_kernel, num_heads=num_heads,
                             head_dim=head_dim, scale=scale, eps=eps)
    x_spec = pl.BlockSpec((1, S, H), lambda b: (b, 0, 0))
    itm = x.dtype.itemsize
    vmem = _vmem_limit(
        wqkv.size * wqkv.dtype.itemsize,      # resident QKV weights
        wo.size * wo.dtype.itemsize,          # resident out-proj weights
        4 * S * H * itm,                      # double-buffered x / out tiles
        S * 3 * H * itm + S * S * 4 + S * H * 4,  # qkv + scores + acc
    )
    return pl.pallas_call(
        kern,
        out_shape=jax.ShapeDtypeStruct((B, S, H), x.dtype),
        grid=(B,),
        in_specs=[x_spec,
                  pl.BlockSpec((H, 3 * H), lambda b: (0, 0)),
                  pl.BlockSpec((1, 3 * H), lambda b: (0, 0)),
                  pl.BlockSpec((H, H), lambda b: (0, 0)),
                  pl.BlockSpec((1, H), lambda b: (0, 0)),
                  pl.BlockSpec((1, H), lambda b: (0, 0)),
                  pl.BlockSpec((1, H), lambda b: (0, 0)),
                  pl.BlockSpec((1, 1, S), lambda b: (b, 0, 0))],
        out_specs=x_spec,
        compiler_params=pltpu.CompilerParams(
            dimension_semantics=("parallel",), vmem_limit_bytes=vmem),
    )(x, wqkv, bqkv.reshape(1, 3 * H), wo, bo.reshape(1, H),
      gamma.reshape(1, H), beta.reshape(1, H), mask_add)


def pallas_ffn_add_ln(x, wi, bi, wo, bo, gamma, beta, eps):
    M, H = x.shape
    I = wi.shape[1]
    bm = _block_rows(M)
    kern = functools.partial(ffn_add_ln_kernel, eps=eps)
    vmem = _vmem_limit(
        wi.size * wi.dtype.itemsize,          # resident wi
        wo.size * wo.dtype.itemsize,          # resident wo2
        4 * bm * H * x.dtype.itemsize,        # double-buffered in / out tiles
        bm * I * 4,                           # f32 intermediate before bf16 cast
    )
    return pl.pallas_call(
        kern,
        out_shape=jax.ShapeDtypeStruct((M, H), x.dtype),
        grid=(M // bm,),
        in_specs=[pl.BlockSpec((bm, H), lambda i: (i, 0)),
                  pl.BlockSpec((H, I), lambda i: (0, 0)),
                  pl.BlockSpec((1, I), lambda i: (0, 0)),
                  pl.BlockSpec((I, H), lambda i: (0, 0)),
                  pl.BlockSpec((1, H), lambda i: (0, 0)),
                  pl.BlockSpec((1, H), lambda i: (0, 0)),
                  pl.BlockSpec((1, H), lambda i: (0, 0))],
        out_specs=pl.BlockSpec((bm, H), lambda i: (i, 0)),
        compiler_params=pltpu.CompilerParams(
            dimension_semantics=("parallel",), vmem_limit_bytes=vmem),
    )(x, wi, bi.reshape(1, I), wo, bo.reshape(1, H),
      gamma.reshape(1, H), beta.reshape(1, H))


# ----------------------------------------------------------------------------
# Mini BERT-style encoder built on the kernels
# ----------------------------------------------------------------------------
class Config:
    vocab_size = 100
    hidden = 32
    num_heads = 4
    head_dim = 8
    intermediate = 64
    num_layers = 2
    max_pos = 16
    ln_eps = 1e-12


def init_params(key, cfg):
    wdt = jnp.bfloat16  # storage dtype for large weights; f32 accumulation in-kernel

    def nrm(k, shape, scale=0.02, dtype=jnp.float32):
        return (scale * jax.random.normal(k, shape)).astype(dtype)

    keys = iter(jax.random.split(key, 8 + cfg.num_layers * 8))
    H, I = cfg.hidden, cfg.intermediate
    p = {
        "word_emb": nrm(next(keys), (cfg.vocab_size, H)),
        "pos_emb": nrm(next(keys), (cfg.max_pos, H)),
        "type_emb": nrm(next(keys), (2, H)),
        "emb_ln_g": jnp.ones((H,), jnp.float32),
        "emb_ln_b": jnp.zeros((H,), jnp.float32),
        "top_w": nrm(next(keys), (H + 1, 1)),
        "top_b": jnp.zeros((1,), jnp.float32),
        "layers": [],
    }
    for _ in range(cfg.num_layers):
        wq = nrm(next(keys), (H, H), dtype=wdt)
        wk = nrm(next(keys), (H, H), dtype=wdt)
        wv = nrm(next(keys), (H, H), dtype=wdt)
        layer = {
            # Q/K/V projections fused ONCE at init (no per-forward concat).
            "wqkv": jnp.concatenate([wq, wk, wv], axis=1),   # (H, 3H) bf16
            "bqkv": jnp.zeros((3 * H,), jnp.float32),
            "wo": nrm(next(keys), (H, H), dtype=wdt),
            "bo": jnp.zeros((H,), jnp.float32),
            "ln1_g": jnp.ones((H,), jnp.float32),
            "ln1_b": jnp.zeros((H,), jnp.float32),
            "wi": nrm(next(keys), (H, I), dtype=wdt),
            "bi": jnp.zeros((I,), jnp.float32),
            "wo2": nrm(next(keys), (I, H), dtype=wdt),
            "bo2": jnp.zeros((H,), jnp.float32),
            "ln2_g": jnp.ones((H,), jnp.float32),
            "ln2_b": jnp.zeros((H,), jnp.float32),
        }
        p["layers"].append(layer)
    return p


def encoder_layer(x, mask_add, lp, cfg):
    B, S, H = x.shape
    scale = 1.0 / math.sqrt(cfg.head_dim)          # Python float (no traced const)
    # fused: QKV proj + MHA + out-proj + residual + LayerNorm (per batch row)
    x = pallas_fused_attention(x, lp["wqkv"], lp["bqkv"], lp["wo"], lp["bo"],
                               lp["ln1_g"], lp["ln1_b"], mask_add,
                               scale, cfg.num_heads, cfg.head_dim, cfg.ln_eps)
    # fused: FFN (wi + gelu + wo2) + residual + LayerNorm (row tiled)
    x2d = pallas_ffn_add_ln(x.reshape(B * S, H), lp["wi"], lp["bi"],
                            lp["wo2"], lp["bo2"],
                            lp["ln2_g"], lp["ln2_b"], cfg.ln_eps)
    return x2d.reshape(B, S, H)


def sample_model_forward(params, cfg, ids, mask, fts):
    """Equivalent of _20SampleModel.forward(ids, mask, fts) in eval mode."""
    B, S = ids.shape
    H = cfg.hidden

    # --- embeddings (gather = glue in JAX), then Pallas LayerNorm -> bf16 ---
    emb = (params["word_emb"][ids]
           + params["pos_emb"][:S][None, :, :]
           + params["type_emb"][0][None, None, :])          # f32 (B, S, H)
    x2d = pallas_layernorm(emb.reshape(B * S, H),
                           params["emb_ln_g"], params["emb_ln_b"], cfg.ln_eps)
    x = x2d.reshape(B, S, H)                                 # bf16

    # additive attention-mask bias (B, 1, S); broadcast over query rows in-kernel
    mask_add = ((1.0 - mask.astype(jnp.float32)) * -1e9)[:, None, :]

    # --- transformer encoder -------------------------------------------------
    for lp in params["layers"]:
        x = encoder_layer(x, mask_add, lp, cfg)

    # --- CLS token + fts -> shared Linear head -------------------------------
    # The 5 dropouts are identity at eval, so mean of 5 identical outputs == y.
    # This (B, H+1)x(H+1, 1) GEMV is too small for a pallas_call: plain JAX.
    x_cls = x[:, 0, :].astype(jnp.float32)                   # (B, H)
    x_cat = jnp.concatenate([x_cls, fts], axis=1)            # (B, H + 1)
    return x_cat @ params["top_w"] + params["top_b"]         # (B, 1) f32


# ----------------------------------------------------------------------------
if __name__ == "__main__":
    cfg = Config()
    B, S = 2, 8

    key = jax.random.PRNGKey(0)
    k_param, k_ids, k_fts = jax.random.split(key, 3)

    params = init_params(k_param, cfg)

    ids = jax.random.randint(k_ids, (B, S), 0, cfg.vocab_size, dtype=jnp.int32)
    mask = jnp.ones((B, S), dtype=jnp.int32).at[1, 6:].set(0)   # a padded row
    fts = jax.random.normal(k_fts, (B, 1), dtype=jnp.float32)

    fwd = jax.jit(sample_model_forward, static_argnums=1)
    out = jax.block_until_ready(fwd(params, cfg, ids, mask, fts))

    assert out.shape == (B, 1)
    assert bool(jnp.all(jnp.isfinite(out)))
    print("KERNEL_OK")
</pallas_src>

<mosaic_0001>
module attributes {stable_mosaic.version = 11 : i64} {
  func.func @layernorm_kernel(%arg0: i32, %arg1: memref<16x32xf32, #tpu.memory_space<vmem>>, %arg2: memref<1x32xf32, #tpu.memory_space<vmem>>, %arg3: memref<1x32xf32, #tpu.memory_space<vmem>>, %arg4: memref<16x32xbf16, #tpu.memory_space<vmem>>) attributes {dimension_semantics = [#tpu.dimension_semantics<parallel>], iteration_bounds = array<i64: 1>, scalar_prefetch = 0 : i64, scratch_operands = 0 : i64, tpu.core_type = #tpu.core_type<tc>, window_params = [{transform_indices = @transform_0, window_bounds = array<i64: 16, 32>}, {pipeline_mode = #tpu.pipeline_mode<synchronous>, transform_indices = @transform_1, window_bounds = array<i64: 1, 32>}, {pipeline_mode = #tpu.pipeline_mode<synchronous>, transform_indices = @transform_2, window_bounds = array<i64: 1, 32>}, {transform_indices = @transform_3, window_bounds = array<i64: 16, 32>}]} {
    %c0 = arith.constant 0 : index
    %c0_0 = arith.constant 0 : index
    %0 = vector.load %arg1[%c0, %c0_0] : memref<16x32xf32, #tpu.memory_space<vmem>>, vector<16x32xf32>
    %c0_1 = arith.constant 0 : index
    %c0_2 = arith.constant 0 : index
    %1 = vector.load %arg2[%c0_1, %c0_2] : memref<1x32xf32, #tpu.memory_space<vmem>>, vector<1x32xf32>
    %c0_3 = arith.constant 0 : index
    %c0_4 = arith.constant 0 : index
    %2 = vector.load %arg3[%c0_3, %c0_4] : memref<1x32xf32, #tpu.memory_space<vmem>>, vector<1x32xf32>
    %cst = arith.constant dense<0.000000e+00> : vector<16xf32>
    %3 = vector.multi_reduction <add>, %0, %cst [1] : vector<16x32xf32> to vector<16xf32>
    %4 = vector.shape_cast %3 : vector<16xf32> to vector<16x1xf32>
    %cst_5 = arith.constant 3.200000e+01 : f32
    %5 = vector.broadcast %cst_5 : f32 to vector<16x1xf32>
    %6 = arith.divf %4, %5 : vector<16x1xf32>
    %7 = vector.broadcast %6 : vector<16x1xf32> to vector<16x32xf32>
    %8 = arith.subf %0, %7 : vector<16x32xf32>
    %9 = vector.broadcast %6 : vector<16x1xf32> to vector<16x32xf32>
    %10 = arith.subf %0, %9 : vector<16x32xf32>
    %11 = arith.mulf %8, %10 : vector<16x32xf32>
    %cst_6 = arith.constant dense<0.000000e+00> : vector<16xf32>
    %12 = vector.multi_reduction <add>, %11, %cst_6 [1] : vector<16x32xf32> to vector<16xf32>
    %13 = vector.shape_cast %12 : vector<16xf32> to vector<16x1xf32>
    %cst_7 = arith.constant 3.200000e+01 : f32
    %14 = vector.broadcast %cst_7 : f32 to vector<16x1xf32>
    %15 = arith.divf %13, %14 : vector<16x1xf32>
    %16 = vector.broadcast %6 : vector<16x1xf32> to vector<16x32xf32>
    %17 = arith.subf %0, %16 : vector<16x32xf32>
    %cst_8 = arith.constant 9.99999996E-13 : f32
    %18 = vector.broadcast %cst_8 : f32 to vector<16x1xf32>
    %19 = arith.addf %15, %18 : vector<16x1xf32>
    %20 = math.rsqrt %19 : vector<16x1xf32>
    %21 = vector.broadcast %20 : vector<16x1xf32> to vector<16x32xf32>
    %22 = arith.mulf %17, %21 : vector<16x32xf32>
    %23 = vector.broadcast %1 : vector<1x32xf32> to vector<16x32xf32>
    %24 = arith.mulf %22, %23 : vector<16x32xf32>
    %25 = vector.broadcast %2 : vector<1x32xf32> to vector<16x32xf32>
    %26 = arith.addf %24, %25 : vector<16x32xf32>
    %27 = arith.truncf %26 : vector<16x32xf32> to vector<16x32xbf16>
    %c0_9 = arith.constant 0 : index
    %c0_10 = arith.constant 0 : index
    %28 = vector.load %arg4[%c0_9, %c0_10] : memref<16x32xbf16, #tpu.memory_space<vmem>>, vector<16x32xbf16>
    tpu.vector_store %arg4[%c0_9, %c0_10], %27 {strides = array<i32>} : memref<16x32xbf16, #tpu.memory_space<vmem>>, vector<16x32xbf16>,
    return
  }
  func.func @transform_0(%arg0: i32) -> (i32, i32) {
    %c0_i32 = arith.constant 0 : i32
    %c0_i32_0 = arith.constant 0 : i32
    return %arg0, %c0_i32 : i32, i32
  }
  func.func @transform_1(%arg0: i32) -> (i32, i32) {
    %c0_i32 = arith.constant 0 : i32
    %c0_i32_0 = arith.constant 0 : i32
    %c0_i32_1 = arith.constant 0 : i32
    return %c0_i32, %c0_i32_0 : i32, i32
  }
  func.func @transform_2(%arg0: i32) -> (i32, i32) {
    %c0_i32 = arith.constant 0 : i32
    %c0_i32_0 = arith.constant 0 : i32
    %c0_i32_1 = arith.constant 0 : i32
    return %c0_i32, %c0_i32_0 : i32, i32
  }
  func.func @transform_3(%arg0: i32) -> (i32, i32) {
    %c0_i32 = arith.constant 0 : i32
    %c0_i32_0 = arith.constant 0 : i32
    return %arg0, %c0_i32 : i32, i32
  }
}

module attributes {stable_mosaic.version = 11 : i64} {
  func.func @ffn_add_ln_kernel(%arg0: i32, %arg1: memref<16x32xbf16, #tpu.memory_space<vmem>>, %arg2: memref<32x64xbf16, #tpu.memory_space<vmem>>, %arg3: memref<1x64xf32, #tpu.memory_space<vmem>>, %arg4: memref<64x32xbf16, #tpu.memory_space<vmem>>, %arg5: memref<1x32xf32, #tpu.memory_space<vmem>>, %arg6: memref<1x32xf32, #tpu.memory_space<vmem>>, %arg7: memref<1x32xf32, #tpu.memory_space<vmem>>, %arg8: memref<16x32xbf16, #tpu.memory_space<vmem>>) attributes {dimension_semantics = [#tpu.dimension_semantics<parallel>], iteration_bounds = array<i64: 1>, scalar_prefetch = 0 : i64, scratch_operands = 0 : i64, tpu.core_type = #tpu.core_type<tc>, window_params = [{transform_indices = @transform_0, window_bounds = array<i64: 16, 32>}, {pipeline_mode = #tpu.pipeline_mode<synchronous>, transform_indices = @transform_1, window_bounds = array<i64: 32, 64>}, {pipeline_mode = #tpu.pipeline_mode<synchronous>, transform_indices = @transform_2, window_bounds = array<i64: 1, 64>}, {pipeline_mode = #tpu.pipeline_mode<synchronous>, transform_indices = @transform_3, window_bounds = array<i64: 64, 32>}, {pipeline_mode = #tpu.pipeline_mode<synchronous>, transform_indices = @transform_4, window_bounds = array<i64: 1, 32>}, {pipeline_mode = #tpu.pipeline_mode<synchronous>, transform_indices = @transform_5, window_bounds = array<i64: 1, 32>}, {pipeline_mode = #tpu.pipeline_mode<synchronous>, transform_indices = @transform_6, window_bounds = array<i64: 1, 32>}, {transform_indices = @transform_7, window_bounds = array<i64: 16, 32>}]} {
    %c0 = arith.constant 0 : index
    %c0_0 = arith.constant 0 : index
    %0 = vector.load %arg1[%c0, %c0_0] : memref<16x32xbf16, #tpu.memory_space<vmem>>, vector<16x32xbf16>
    %c0_1 = arith.constant 0 : index
    %c0_2 = arith.constant 0 : index
    %1 = vector.load %arg2[%c0_1, %c0_2] : memref<32x64xbf16, #tpu.memory_space<vmem>>, vector<32x64xbf16>
    %cst = arith.constant dense<0.000000e+00> : vector<16x64xf32>
    %2 = tpu.matmul %0, %1, %cst {dimension_numbers = #tpu.dot_dimension_numbers<[1], [0], [0], [1], [0, 0, 1, 1], [], []>} : vector<16x32xbf16>, vector<32x64xbf16>, vector<16x64xf32> -> vector<16x64xf32>
    %c0_3 = arith.constant 0 : index
    %c0_4 = arith.constant 0 : index
    %3 = vector.load %arg3[%c0_3, %c0_4] : memref<1x64xf32, #tpu.memory_space<vmem>>, vector<1x64xf32>
    %4 = vector.broadcast %3 : vector<1x64xf32> to vector<16x64xf32>
    %5 = arith.addf %2, %4 : vector<16x64xf32>
    %cst_5 = arith.constant 5.000000e-01 : f32
    %6 = vector.broadcast %cst_5 : f32 to vector<16x64xf32>
    %7 = arith.mulf %6, %5 : vector<16x64xf32>
    %cst_6 = arith.constant 4.471500e-02 : f32
    %8 = vector.broadcast %cst_6 : f32 to vector<16x64xf32>
    %9 = arith.mulf %8, %5 : vector<16x64xf32>
    %10 = arith.mulf %9, %5 : vector<16x64xf32>
    %11 = arith.mulf %10, %5 : vector<16x64xf32>
    %12 = arith.addf %5, %11 : vector<16x64xf32>
    %cst_7 = arith.constant 0.797884583 : f32
    %13 = vector.broadcast %cst_7 : f32 to vector<16x64xf32>
    %14 = arith.mulf %13, %12 : vector<16x64xf32>
    %15 = math.tanh %14 : vector<16x64xf32>
    %cst_8 = arith.constant 1.000000e+00 : f32
    %16 = vector.broadcast %cst_8 : f32 to vector<16x64xf32>
    %17 = arith.addf %16, %15 : vector<16x64xf32>
    %18 = arith.mulf %7, %17 : vector<16x64xf32>
    %19 = arith.truncf %18 : vector<16x64xf32> to vector<16x64xbf16>
    %c0_9 = arith.constant 0 : index
    %c0_10 = arith.constant 0 : index
    %20 = vector.load %arg4[%c0_9, %c0_10] : memref<64x32xbf16, #tpu.memory_space<vmem>>, vector<64x32xbf16>
    %cst_11 = arith.constant dense<0.000000e+00> : vector<16x32xf32>
    %21 = tpu.matmul %19, %20, %cst_11 {dimension_numbers = #tpu.dot_dimension_numbers<[1], [0], [0], [1], [0, 0, 1, 1], [], []>} : vector<16x64xbf16>, vector<64x32xbf16>, vector<16x32xf32> -> vector<16x32xf32>
    %c0_12 = arith.constant 0 : index
    %c0_13 = arith.constant 0 : index
    %22 = vector.load %arg5[%c0_12, %c0_13] : memref<1x32xf32, #tpu.memory_space<vmem>>, vector<1x32xf32>
    %23 = vector.broadcast %22 : vector<1x32xf32> to vector<16x32xf32>
    %24 = arith.addf %21, %23 : vector<16x32xf32>
    %25 = arith.extf %0 : vector<16x32xbf16> to vector<16x32xf32>
    %26 = arith.addf %25, %24 : vector<16x32xf32>
    %c0_14 = arith.constant 0 : index
    %c0_15 = arith.constant 0 : index
    %27 = vector.load %arg6[%c0_14, %c0_15] : memref<1x32xf32, #tpu.memory_space<vmem>>, vector<1x32xf32>
    %c0_16 = arith.constant 0 : index
    %c0_17 = arith.constant 0 : index
    %28 = vector.load %arg7[%c0_16, %c0_17] : memref<1x32xf32, #tpu.memory_space<vmem>>, vector<1x32xf32>
    %cst_18 = arith.constant dense<0.000000e+00> : vector<16xf32>
    %29 = vector.multi_reduction <add>, %26, %cst_18 [1] : vector<16x32xf32> to vector<16xf32>
    %30 = vector.shape_cast %29 : vector<16xf32> to vector<16x1xf32>
    %cst_19 = arith.constant 3.200000e+01 : f32
    %31 = vector.broadcast %cst_19 : f32 to vector<16x1xf32>
    %32 = arith.divf %30, %31 : vector<16x1xf32>
    %33 = vector.broadcast %32 : vector<16x1xf32> to vector<16x32xf32>
    %34 = arith.subf %26, %33 : vector<16x32xf32>
    %35 = vector.broadcast %32 : vector<16x1xf32> to vector<16x32xf32>
    %36 = arith.subf %26, %35 : vector<16x32xf32>
    %37 = arith.mulf %34, %36 : vector<16x32xf32>
    %cst_20 = arith.constant dense<0.000000e+00> : vector<16xf32>
    %38 = vector.multi_reduction <add>, %37, %cst_20 [1] : vector<16x32xf32> to vector<16xf32>
    %39 = vector.shape_cast %38 : vector<16xf32> to vector<16x1xf32>
    %cst_21 = arith.constant 3.200000e+01 : f32
    %40 = vector.broadcast %cst_21 : f32 to vector<16x1xf32>
    %41 = arith.divf %39, %40 : vector<16x1xf32>
    %42 = vector.broadcast %32 : vector<16x1xf32> to vector<16x32xf32>
    %43 = arith.subf %26, %42 : vector<16x32xf32>
    %cst_22 = arith.constant 9.99999996E-13 : f32
    %44 = vector.broadcast %cst_22 : f32 to vector<16x1xf32>
    %45 = arith.addf %41, %44 : vector<16x1xf32>
    %46 = math.rsqrt %45 : vector<16x1xf32>
    %47 = vector.broadcast %46 : vector<16x1xf32> to vector<16x32xf32>
    %48 = arith.mulf %43, %47 : vector<16x32xf32>
    %49 = vector.broadcast %27 : vector<1x32xf32> to vector<16x32xf32>
    %50 = arith.mulf %48, %49 : vector<16x32xf32>
    %51 = vector.broadcast %28 : vector<1x32xf32> to vector<16x32xf32>
    %52 = arith.addf %50, %51 : vector<16x32xf32>
    %53 = arith.truncf %52 : vector<16x32xf32> to vector<16x32xbf16>
    %c0_23 = arith.constant 0 : index
    %c0_24 = arith.constant 0 : index
    %54 = vector.load %arg8[%c0_23, %c0_24] : memref<16x32xbf16, #tpu.memory_space<vmem>>, vector<16x32xbf16>
    tpu.vector_store %arg8[%c0_23, %c0_24], %53 {strides = array<i32>} : memref<16x32xbf16, #tpu.memory_space<vmem>>, vector<16x32xbf16>,
    return
  }
  func.func @transform_0(%arg0: i32) -> (i32, i32) {
    %c0_i32 = arith.constant 0 : i32
    %c0_i32_0 = arith.constant 0 : i32
    return %arg0, %c0_i32 : i32, i32
  }
  func.func @transform_1(%arg0: i32) -> (i32, i32) {
    %c0_i32 = arith.constant 0 : i32
    %c0_i32_0 = arith.constant 0 : i32
    %c0_i32_1 = arith.constant 0 : i32
    return %c0_i32, %c0_i32_0 : i32, i32
  }
  func.func @transform_2(%arg0: i32) -> (i32, i32) {
    %c0_i32 = arith.constant 0 : i32
    %c0_i32_0 = arith.constant 0 : i32
    %c0_i32_1 = arith.constant 0 : i32
    return %c0_i32, %c0_i32_0 : i32, i32
  }
  func.func @transform_3(%arg0: i32) -> (i32, i32) {
    %c0_i32 = arith.constant 0 : i32
    %c0_i32_0 = arith.constant 0 : i32
    %c0_i32_1 = arith.constant 0 : i32
    return %c0_i32, %c0_i32_0 : i32, i32
  }
  func.func @transform_4(%arg0: i32) -> (i32, i32) {
    %c0_i32 = arith.constant 0 : i32
    %c0_i32_0 = arith.constant 0 : i32
    %c0_i32_1 = arith.constant 0 : i32
    return %c0_i32, %c0_i32_0 : i32, i32
  }
  func.func @transform_5(%arg0: i32) -> (i32, i32) {
    %c0_i32 = arith.constant 0 : i32
    %c0_i32_0 = arith.constant 0 : i32
    %c0_i32_1 = arith.constant 0 : i32
    return %c0_i32, %c0_i32_0 : i32, i32
  }
  func.func @transform_6(%arg0: i32) -> (i32, i32) {
    %c0_i32 = arith.constant 0 : i32
    %c0_i32_0 = arith.constant 0 : i32
    %c0_i32_1 = arith.constant 0 : i32
    return %c0_i32, %c0_i32_0 : i32, i32
  }
  func.func @transform_7(%arg0: i32) -> (i32, i32) {
    %c0_i32 = arith.constant 0 : i32
    %c0_i32_0 = arith.constant 0 : i32
    return %arg0, %c0_i32 : i32, i32
  }
}

module attributes {stable_mosaic.version = 11 : i64} {
  func.func @fused_attn_kernel(%arg0: i32, %arg1: memref<1x8x32xbf16, #tpu.memory_space<vmem>>, %arg2: memref<32x96xbf16, #tpu.memory_space<vmem>>, %arg3: memref<1x96xf32, #tpu.memory_space<vmem>>, %arg4: memref<32x32xbf16, #tpu.memory_space<vmem>>, %arg5: memref<1x32xf32, #tpu.memory_space<vmem>>, %arg6: memref<1x32xf32, #tpu.memory_space<vmem>>, %arg7: memref<1x32xf32, #tpu.memory_space<vmem>>, %arg8: memref<1x1x8xf32, #tpu.memory_space<vmem>>, %arg9: memref<1x8x32xbf16, #tpu.memory_space<vmem>>) attributes {dimension_semantics = [#tpu.dimension_semantics<parallel>], iteration_bounds = array<i64: 2>, scalar_prefetch = 0 : i64, scratch_operands = 0 : i64, tpu.core_type = #tpu.core_type<tc>, window_params = [{transform_indices = @transform_0, window_bounds = array<i64: 1, 8, 32>}, {pipeline_mode = #tpu.pipeline_mode<synchronous>, transform_indices = @transform_1, window_bounds = array<i64: 32, 96>}, {pipeline_mode = #tpu.pipeline_mode<synchronous>, transform_indices = @transform_2, window_bounds = array<i64: 1, 96>}, {pipeline_mode = #tpu.pipeline_mode<synchronous>, transform_indices = @transform_3, window_bounds = array<i64: 32, 32>}, {pipeline_mode = #tpu.pipeline_mode<synchronous>, transform_indices = @transform_4, window_bounds = array<i64: 1, 32>}, {pipeline_mode = #tpu.pipeline_mode<synchronous>, transform_indices = @transform_5, window_bounds = array<i64: 1, 32>}, {pipeline_mode = #tpu.pipeline_mode<synchronous>, transform_indices = @transform_6, window_bounds = array<i64: 1, 32>}, {transform_indices = @transform_7, window_bounds = array<i64: 1, 1, 8>}, {transform_indices = @transform_8, window_bounds = array<i64: 1, 8, 32>}]} {
    %c0 = arith.constant 0 : index
    %c0_0 = arith.constant 0 : index
    %c0_1 = arith.constant 0 : index
    %0 = vector.load %arg1[%c0, %c0_0, %c0_1] : memref<1x8x32xbf16, #tpu.memory_space<vmem>>, vector<1x8x32xbf16>
    %1 = vector.shape_cast %0 : vector<1x8x32xbf16> to vector<8x32xbf16>
    %c0_2 = arith.constant 0 : index
    %c0_3 = arith.constant 0 : index
    %2 = vector.load %arg2[%c0_2, %c0_3] : memref<32x96xbf16, #tpu.memory_space<vmem>>, vector<32x96xbf16>
    %cst = arith.constant dense<0.000000e+00> : vector<8x96xf32>
    %3 = tpu.matmul %1, %2, %cst {dimension_numbers = #tpu.dot_dimension_numbers<[1], [0], [0], [1], [0, 0, 1, 1], [], []>} : vector<8x32xbf16>, vector<32x96xbf16>, vector<8x96xf32> -> vector<8x96xf32>
    %c0_4 = arith.constant 0 : index
    %c0_5 = arith.constant 0 : index
    %4 = vector.load %arg3[%c0_4, %c0_5] : memref<1x96xf32, #tpu.memory_space<vmem>>, vector<1x96xf32>
    %5 = vector.broadcast %4 : vector<1x96xf32> to vector<8x96xf32>
    %6 = arith.addf %3, %5 : vector<8x96xf32>
    %7 = arith.truncf %6 : vector<8x96xf32> to vector<8x96xbf16>
    %c0_6 = arith.constant 0 : index
    %c0_7 = arith.constant 0 : index
    %c0_8 = arith.constant 0 : index
    %8 = vector.load %arg8[%c0_6, %c0_7, %c0_8] : memref<1x1x8xf32, #tpu.memory_space<vmem>>, vector<1x1x8xf32>
    %9 = vector.shape_cast %8 : vector<1x1x8xf32> to vector<1x8xf32>
    %c0_9 = arith.constant 0 : index
    %c0_10 = arith.constant 0 : index
    %10 = vector.load %arg4[%c0_9, %c0_10] : memref<32x32xbf16, #tpu.memory_space<vmem>>, vector<32x32xbf16>
    %cst_11 = arith.constant 0.000000e+00 : f32
    %11 = vector.broadcast %cst_11 : f32 to vector<8x32xf32>
    %12 = vector.extract_strided_slice %7 {offsets = [0, 0], sizes = [8, 8], strides = [1, 1]} : vector<8x96xbf16> to vector<8x8xbf16>
    %13 = vector.extract_strided_slice %7 {offsets = [0, 32], sizes = [8, 8], strides = [1, 1]} : vector<8x96xbf16> to vector<8x8xbf16>
    %14 = vector.extract_strided_slice %7 {offsets = [0, 64], sizes = [8, 8], strides = [1, 1]} : vector<8x96xbf16> to vector<8x8xbf16>
    %cst_12 = arith.constant dense<0.000000e+00> : vector<8x8xf32>
    %15 = tpu.matmul %12, %13, %cst_12 {dimension_numbers = #tpu.dot_dimension_numbers<[1], [1], [0], [0], [0, 0, 1, 0], [], []>} : vector<8x8xbf16>, vector<8x8xbf16>, vector<8x8xf32> -> vector<8x8xf32>
    %cst_13 = arith.constant 0.353553385 : f32
    %16 = vector.broadcast %cst_13 : f32 to vector<8x8xf32>
    %17 = arith.mulf %15, %16 : vector<8x8xf32>
    %18 = vector.broadcast %9 : vector<1x8xf32> to vector<8x8xf32>
    %19 = arith.addf %17, %18 : vector<8x8xf32>
    %cst_14 = arith.constant dense<0xFF800000> : vector<8xf32>
    %20 = vector.multi_reduction <maximumf>, %19, %cst_14 [1] : vector<8x8xf32> to vector<8xf32>
    %21 = vector.shape_cast %20 : vector<8xf32> to vector<8x1xf32>
    %22 = vector.broadcast %21 : vector<8x1xf32> to vector<8x8xf32>
    %23 = arith.subf %19, %22 : vector<8x8xf32>
    %24 = math.exp %23 : vector<8x8xf32>
    %cst_15 = arith.constant dense<0.000000e+00> : vector<8xf32>
    %25 = vector.multi_reduction <add>, %24, %cst_15 [1] : vector<8x8xf32> to vector<8xf32>
    %26 = vector.shape_cast %25 : vector<8xf32> to vector<8x1xf32>
    %27 = tpu.reciprocal %26 {approx = true} : vector<8x1xf32> -> vector<8x1xf32>
    %28 = vector.broadcast %27 : vector<8x1xf32> to vector<8x8xf32>
    %29 = arith.mulf %24, %28 : vector<8x8xf32>
    %30 = arith.truncf %29 : vector<8x8xf32> to vector<8x8xbf16>
    %cst_16 = arith.constant dense<0.000000e+00> : vector<8x8xf32>
    %31 = tpu.matmul %30, %14, %cst_16 {dimension_numbers = #tpu.dot_dimension_numbers<[1], [0], [0], [1], [0, 0, 1, 1], [], []>} : vector<8x8xbf16>, vector<8x8xbf16>, vector<8x8xf32> -> vector<8x8xf32>
    %32 = arith.truncf %31 : vector<8x8xf32> to vector<8x8xbf16>
    %33 = vector.extract_strided_slice %10 {offsets = [0, 0], sizes = [8, 32], strides = [1, 1]} : vector<32x32xbf16> to vector<8x32xbf16>
    %cst_17 = arith.constant dense<0.000000e+00> : vector<8x32xf32>
    %34 = tpu.matmul %32, %33, %cst_17 {dimension_numbers = #tpu.dot_dimension_numbers<[1], [0], [0], [1], [0, 0, 1, 1], [], []>} : vector<8x8xbf16>, vector<8x32xbf16>, vector<8x32xf32> -> vector<8x32xf32>
    %35 = arith.addf %11, %34 : vector<8x32xf32>
    %36 = vector.extract_strided_slice %7 {offsets = [0, 8], sizes = [8, 8], strides = [1, 1]} : vector<8x96xbf16> to vector<8x8xbf16>
    %37 = vector.extract_strided_slice %7 {offsets = [0, 40], sizes = [8, 8], strides = [1, 1]} : vector<8x96xbf16> to vector<8x8xbf16>
    %38 = vector.extract_strided_slice %7 {offsets = [0, 72], sizes = [8, 8], strides = [1, 1]} : vector<8x96xbf16> to vector<8x8xbf16>
    %cst_18 = arith.constant dense<0.000000e+00> : vector<8x8xf32>
    %39 = tpu.matmul %36, %37, %cst_18 {dimension_numbers = #tpu.dot_dimension_numbers<[1], [1], [0], [0], [0, 0, 1, 0], [], []>} : vector<8x8xbf16>, vector<8x8xbf16>, vector<8x8xf32> -> vector<8x8xf32>
    %cst_19 = arith.constant 0.353553385 : f32
    %40 = vector.broadcast %cst_19 : f32 to vector<8x8xf32>
    %41 = arith.mulf %39, %40 : vector<8x8xf32>
    %42 = vector.broadcast %9 : vector<1x8xf32> to vector<8x8xf32>
    %43 = arith.addf %41, %42 : vector<8x8xf32>
    %cst_20 = arith.constant dense<0xFF800000> : vector<8xf32>
    %44 = vector.multi_reduction <maximumf>, %43, %cst_20 [1] : vector<8x8xf32> to vector<8xf32>
    %45 = vector.shape_cast %44 : vector<8xf32> to vector<8x1xf32>
    %46 = vector.broadcast %45 : vector<8x1xf32> to vector<8x8xf32>
    %47 = arith.subf %43, %46 : vector<8x8xf32>
    %48 = math.exp %47 : vector<8x8xf32>
    %cst_21 = arith.constant dense<0.000000e+00> : vector<8xf32>
    %49 = vector.multi_reduction <add>, %48, %cst_21 [1] : vector<8x8xf32> to vector<8xf32>
    %50 = vector.shape_cast %49 : vector<8xf32> to vector<8x1xf32>
    %51 = tpu.reciprocal %50 {approx = true} : vector<8x1xf32> -> vector<8x1xf32>
    %52 = vector.broadcast %51 : vector<8x1xf32> to vector<8x8xf32>
    %53 = arith.mulf %48, %52 : vector<8x8xf32>
    %54 = arith.truncf %53 : vector<8x8xf32> to vector<8x8xbf16>
    %cst_22 = arith.constant dense<0.000000e+00> : vector<8x8xf32>
    %55 = tpu.matmul %54, %38, %cst_22 {dimension_numbers = #tpu.dot_dimension_numbers<[1], [0], [0], [1], [0, 0, 1, 1], [], []>} : vector<8x8xbf16>, vector<8x8xbf16>, vector<8x8xf32> -> vector<8x8xf32>
    %56 = arith.truncf %55 : vector<8x8xf32> to vector<8x8xbf16>
    %57 = vector.extract_strided_slice %10 {offsets = [8, 0], sizes = [8, 32], strides = [1, 1]} : vector<32x32xbf16> to vector<8x32xbf16>
    %cst_23 = arith.constant dense<0.000000e+00> : vector<8x32xf32>
    %58 = tpu.matmul %56, %57, %cst_23 {dimension_numbers = #tpu.dot_dimension_numbers<[1], [0], [0], [1], [0, 0, 1, 1], [], []>} : vector<8x8xbf16>, vector<8x32xbf16>, vector<8x32xf32> -> vector<8x32xf32>
    %59 = arith.addf %35, %58 : vector<8x32xf32>
    %60 = vector.extract_strided_slice %7 {offsets = [0, 16], sizes = [8, 8], strides = [1, 1]} : vector<8x96xbf16> to vector<8x8xbf16>
    %61 = vector.extract_strided_slice %7 {offsets = [0, 48], sizes = [8, 8], strides = [1, 1]} : vector<8x96xbf16> to vector<8x8xbf16>
    %62 = vector.extract_strided_slice %7 {offsets = [0, 80], sizes = [8, 8], strides = [1, 1]} : vector<8x96xbf16> to vector<8x8xbf16>
    %cst_24 = arith.constant dense<0.000000e+00> : vector<8x8xf32>
    %63 = tpu.matmul %60, %61, %cst_24 {dimension_numbers = #tpu.dot_dimension_numbers<[1], [1], [0], [0], [0, 0, 1, 0], [], []>} : vector<8x8xbf16>, vector<8x8xbf16>, vector<8x8xf32> -> vector<8x8xf32>
    %cst_25 = arith.constant 0.353553385 : f32
    %64 = vector.broadcast %cst_25 : f32 to vector<8x8xf32>
    %65 = arith.mulf %63, %64 : vector<8x8xf32>
    %66 = vector.broadcast %9 : vector<1x8xf32> to vector<8x8xf32>
    %67 = arith.addf %65, %66 : vector<8x8xf32>
    %cst_26 = arith.constant dense<0xFF800000> : vector<8xf32>
    %68 = vector.multi_reduction <maximumf>, %67, %cst_26 [1] : vector<8x8xf32> to vector<8xf32>
    %69 = vector.shape_cast %68 : vector<8xf32> to vector<8x1xf32>
    %70 = vector.broadcast %69 : vector<8x1xf32> to vector<8x8xf32>
    %71 = arith.subf %67, %70 : vector<8x8xf32>
    %72 = math.exp %71 : vector<8x8xf32>
    %cst_27 = arith.constant dense<0.000000e+00> : vector<8xf32>
    %73 = vector.multi_reduction <add>, %72, %cst_27 [1] : vector<8x8xf32> to vector<8xf32>
    %74 = vector.shape_cast %73 : vector<8xf32> to vector<8x1xf32>
    %75 = tpu.reciprocal %74 {approx = true} : vector<8x1xf32> -> vector<8x1xf32>
    %76 = vector.broadcast %75 : vector<8x1xf32> to vector<8x8xf32>
    %77 = arith.mulf %72, %76 : vector<8x8xf32>
    %78 = arith.truncf %77 : vector<8x8xf32> to vector<8x8xbf16>
    %cst_28 = arith.constant dense<0.000000e+00> : vector<8x8xf32>
    %79 = tpu.matmul %78, %62, %cst_28 {dimension_numbers = #tpu.dot_dimension_numbers<[1], [0], [0], [1], [0, 0, 1, 1], [], []>} : vector<8x8xbf16>, vector<8x8xbf16>, vector<8x8xf32> -> vector<8x8xf32>
    %80 = arith.truncf %79 : vector<8x8xf32> to vector<8x8xbf16>
    %81 = vector.extract_strided_slice %10 {offsets = [16, 0], sizes = [8, 32], strides = [1, 1]} : vector<32x32xbf16> to vector<8x32xbf16>
    %cst_29 = arith.constant dense<0.000000e+00> : vector<8x32xf32>
    %82 = tpu.matmul %80, %81, %cst_29 {dimension_numbers = #tpu.dot_dimension_numbers<[1], [0], [0], [1], [0, 0, 1, 1], [], []>} : vector<8x8xbf16>, vector<8x32xbf16>, vector<8x32xf32> -> vector<8x32xf32>
    %83 = arith.addf %59, %82 : vector<8x32xf32>
    %84 = vector.extract_strided_slice %7 {offsets = [0, 24], sizes = [8, 8], strides = [1, 1]} : vector<8x96xbf16> to vector<8x8xbf16>
    %85 = vector.extract_strided_slice %7 {offsets = [0, 56], sizes = [8, 8], strides = [1, 1]} : vector<8x96xbf16> to vector<8x8xbf16>
    %86 = vector.extract_strided_slice %7 {offsets = [0, 88], sizes = [8, 8], strides = [1, 1]} : vector<8x96xbf16> to vector<8x8xbf16>
    %cst_30 = arith.constant dense<0.000000e+00> : vector<8x8xf32>
    %87 = tpu.matmul %84, %85, %cst_30 {dimension_numbers = #tpu.dot_dimension_numbers<[1], [1], [0], [0], [0, 0, 1, 0], [], []>} : vector<8x8xbf16>, vector<8x8xbf16>, vector<8x8xf32> -> vector<8x8xf32>
    %cst_31 = arith.constant 0.353553385 : f32
    %88 = vector.broadcast %cst_31 : f32 to vector<8x8xf32>
    %89 = arith.mulf %87, %88 : vector<8x8xf32>
    %90 = vector.broadcast %9 : vector<1x8xf32> to vector<8x8xf32>
    %91 = arith.addf %89, %90 : vector<8x8xf32>
    %cst_32 = arith.constant dense<0xFF800000> : vector<8xf32>
    %92 = vector.multi_reduction <maximumf>, %91, %cst_32 [1] : vector<8x8xf32> to vector<8xf32>
    %93 = vector.shape_cast %92 : vector<8xf32> to vector<8x1xf32>
    %94 = vector.broadcast %93 : vector<8x1xf32> to vector<8x8xf32>
    %95 = arith.subf %91, %94 : vector<8x8xf32>
    %96 = math.exp %95 : vector<8x8xf32>
    %cst_33 = arith.constant dense<0.000000e+00> : vector<8xf32>
    %97 = vector.multi_reduction <add>, %96, %cst_33 [1] : vector<8x8xf32> to vector<8xf32>
    %98 = vector.shape_cast %97 : vector<8xf32> to vector<8x1xf32>
    %99 = tpu.reciprocal %98 {approx = true} : vector<8x1xf32> -> vector<8x1xf32>
    %100 = vector.broadcast %99 : vector<8x1xf32> to vector<8x8xf32>
    %101 = arith.mulf %96, %100 : vector<8x8xf32>
    %102 = arith.truncf %101 : vector<8x8xf32> to vector<8x8xbf16>
    %cst_34 = arith.constant dense<0.000000e+00> : vector<8x8xf32>
    %103 = tpu.matmul %102, %86, %cst_34 {dimension_numbers = #tpu.dot_dimension_numbers<[1], [0], [0], [1], [0, 0, 1, 1], [], []>} : vector<8x8xbf16>, vector<8x8xbf16>, vector<8x8xf32> -> vector<8x8xf32>
    %104 = arith.truncf %103 : vector<8x8xf32> to vector<8x8xbf16>
    %105 = vector.extract_strided_slice %10 {offsets = [24, 0], sizes = [8, 32], strides = [1, 1]} : vector<32x32xbf16> to vector<8x32xbf16>
    %cst_35 = arith.constant dense<0.000000e+00> : vector<8x32xf32>
    %106 = tpu.matmul %104, %105, %cst_35 {dimension_numbers = #tpu.dot_dimension_numbers<[1], [0], [0], [1], [0, 0, 1, 1], [], []>} : vector<8x8xbf16>, vector<8x32xbf16>, vector<8x32xf32> -> vector<8x32xf32>
    %107 = arith.addf %83, %106 : vector<8x32xf32>
    %108 = arith.extf %1 : vector<8x32xbf16> to vector<8x32xf32>
    %109 = arith.addf %108, %107 : vector<8x32xf32>
    %c0_36 = arith.constant 0 : index
    %c0_37 = arith.constant 0 : index
    %110 = vector.load %arg5[%c0_36, %c0_37] : memref<1x32xf32, #tpu.memory_space<vmem>>, vector<1x32xf32>
    %111 = vector.broadcast %110 : vector<1x32xf32> to vector<8x32xf32>
    %112 = arith.addf %109, %111 : vector<8x32xf32>
    %c0_38 = arith.constant 0 : index
    %c0_39 = arith.constant 0 : index
    %113 = vector.load %arg6[%c0_38, %c0_39] : memref<1x32xf32, #tpu.memory_space<vmem>>, vector<1x32xf32>
    %c0_40 = arith.constant 0 : index
    %c0_41 = arith.constant 0 : index
    %114 = vector.load %arg7[%c0_40, %c0_41] : memref<1x32xf32, #tpu.memory_space<vmem>>, vector<1x32xf32>
    %cst_42 = arith.constant dense<0.000000e+00> : vector<8xf32>
    %115 = vector.multi_reduction <add>, %112, %cst_42 [1] : vector<8x32xf32> to vector<8xf32>
    %116 = vector.shape_cast %115 : vector<8xf32> to vector<8x1xf32>
    %cst_43 = arith.constant 3.200000e+01 : f32
    %117 = vector.broadcast %cst_43 : f32 to vector<8x1xf32>
    %118 = arith.divf %116, %117 : vector<8x1xf32>
    %119 = vector.broadcast %118 : vector<8x1xf32> to vector<8x32xf32>
    %120 = arith.subf %112, %119 : vector<8x32xf32>
    %121 = vector.broadcast %118 : vector<8x1xf32> to vector<8x32xf32>
    %122 = arith.subf %112, %121 : vector<8x32xf32>
    %123 = arith.mulf %120, %122 : vector<8x32xf32>
    %cst_44 = arith.constant dense<0.000000e+00> : vector<8xf32>
    %124 = vector.multi_reduction <add>, %123, %cst_44 [1] : vector<8x32xf32> to vector<8xf32>
    %125 = vector.shape_cast %124 : vector<8xf32> to vector<8x1xf32>
    %cst_45 = arith.constant 3.200000e+01 : f32
    %126 = vector.broadcast %cst_45 : f32 to vector<8x1xf32>
    %127 = arith.divf %125, %126 : vector<8x1xf32>
    %128 = vector.broadcast %118 : vector<8x1xf32> to vector<8x32xf32>
    %129 = arith.subf %112, %128 : vector<8x32xf32>
    %cst_46 = arith.constant 9.99999996E-13 : f32
    %130 = vector.broadcast %cst_46 : f32 to vector<8x1xf32>
    %131 = arith.addf %127, %130 : vector<8x1xf32>
    %132 = math.rsqrt %131 : vector<8x1xf32>
    %133 = vector.broadcast %132 : vector<8x1xf32> to vector<8x32xf32>
    %134 = arith.mulf %129, %133 : vector<8x32xf32>
    %135 = vector.broadcast %113 : vector<1x32xf32> to vector<8x32xf32>
    %136 = arith.mulf %134, %135 : vector<8x32xf32>
    %137 = vector.broadcast %114 : vector<1x32xf32> to vector<8x32xf32>
    %138 = arith.addf %136, %137 : vector<8x32xf32>
    %139 = arith.truncf %138 : vector<8x32xf32> to vector<8x32xbf16>
    %c0_47 = arith.constant 0 : index
    %c0_48 = arith.constant 0 : index
    %c0_49 = arith.constant 0 : index
    %140 = vector.load %arg9[%c0_47, %c0_48, %c0_49] : memref<1x8x32xbf16, #tpu.memory_space<vmem>>, vector<1x8x32xbf16>
    %141 = vector.shape_cast %140 : vector<1x8x32xbf16> to vector<8x32xbf16>
    %142 = vector.shape_cast %139 : vector<8x32xbf16> to vector<1x8x32xbf16>
    tpu.vector_store %arg9[%c0_47, %c0_48, %c0_49], %142 {strides = array<i32>} : memref<1x8x32xbf16, #tpu.memory_space<vmem>>, vector<1x8x32xbf16>,
    return
  }
  func.func @transform_0(%arg0: i32) -> (i32, i32, i32) {
    %c0_i32 = arith.constant 0 : i32
    %c0_i32_0 = arith.constant 0 : i32
    %c0_i32_1 = arith.constant 0 : i32
    return %arg0, %c0_i32, %c0_i32_0 : i32, i32, i32
  }
  func.func @transform_1(%arg0: i32) -> (i32, i32) {
    %c0_i32 = arith.constant 0 : i32
    %c0_i32_0 = arith.constant 0 : i32
    %c0_i32_1 = arith.constant 0 : i32
    return %c0_i32, %c0_i32_0 : i32, i32
  }
  func.func @transform_2(%arg0: i32) -> (i32, i32) {
    %c0_i32 = arith.constant 0 : i32
    %c0_i32_0 = arith.constant 0 : i32
    %c0_i32_1 = arith.constant 0 : i32
    return %c0_i32, %c0_i32_0 : i32, i32
  }
  func.func @transform_3(%arg0: i32) -> (i32, i32) {
    %c0_i32 = arith.constant 0 : i32
    %c0_i32_0 = arith.constant 0 : i32
    %c0_i32_1 = arith.constant 0 : i32
    return %c0_i32, %c0_i32_0 : i32, i32
  }
  func.func @transform_4(%arg0: i32) -> (i32, i32) {
    %c0_i32 = arith.constant 0 : i32
    %c0_i32_0 = arith.constant 0 : i32
    %c0_i32_1 = arith.constant 0 : i32
    return %c0_i32, %c0_i32_0 : i32, i32
  }
  func.func @transform_5(%arg0: i32) -> (i32, i32) {
    %c0_i32 = arith.constant 0 : i32
    %c0_i32_0 = arith.constant 0 : i32
    %c0_i32_1 = arith.constant 0 : i32
    return %c0_i32, %c0_i32_0 : i32, i32
  }
  func.func @transform_6(%arg0: i32) -> (i32, i32) {
    %c0_i32 = arith.constant 0 : i32
    %c0_i32_0 = arith.constant 0 : i32
    %c0_i32_1 = arith.constant 0 : i32
    return %c0_i32, %c0_i32_0 : i32, i32
  }
  func.func @transform_7(%arg0: i32) -> (i32, i32, i32) {
    %c0_i32 = arith.constant 0 : i32
    %c0_i32_0 = arith.constant 0 : i32
    %c0_i32_1 = arith.constant 0 : i32
    return %arg0, %c0_i32, %c0_i32_0 : i32, i32, i32
  }
  func.func @transform_8(%arg0: i32) -> (i32, i32, i32) {
    %c0_i32 = arith.constant 0 : i32
    %c0_i32_0 = arith.constant 0 : i32
    %c0_i32_1 = arith.constant 0 : i32
    return %arg0, %c0_i32, %c0_i32_0 : i32, i32, i32
  }
}

</mosaic_0001>

<llo_original>
// kernel: sample_model_forward.5
$region0: #{sample_model_forward.5}
  #allocation0 [shape = 'u32[]', space=smem, size = 0x4, offset = 0x4, fixed_abs, tag = 'smem constant byte address 0x4 - core index']
  #allocation1 [shape = 'u32[144,128]{1,0:T(1,128)}', space=vmem, size = 0x12000, scoped, tag = 'internal scratch']
  %s0 = inlined_call_operand.vmem [shape: f32[16,32], index: 0, kind: input, shape index: {}]
  %s1 = inlined_call_operand.vmem [shape: f32[1,32], index: 1, kind: input, shape index: {}]
  %s2 = inlined_call_operand.vmem [shape: f32[1,32], index: 2, kind: input, shape index: {}]
  %s3 = inlined_call_operand.vmem [shape: bf16[16,32], index: 3, kind: output, shape index: {}]
  %s4 = sld [smem:[#allocation0]]
  $region22: #{sample_model_forward.5} parent=0
    _
  %s6 = ssub.s32 1, %s4
  %s7 = scalar_select 0, %s6, %s4
  // Predicated region
  $region2: #{sample_model_forward.5} parent=0 // pred_check
    _
  $region3: #{sample_model_forward.5} parent=0 // pred_check_branch
    %9 = sbr.rel (0) target = $region5
  $region4: #{sample_model_forward.5} parent=0 // pred_region
    _
  $region5: #{sample_model_forward.5} parent=0 // pred_fallthru
    _
  // Predicated region
  $region6: #{sample_model_forward.5} parent=0 // pred_check
    _
  $region7: #{sample_model_forward.5} parent=0 // pred_check_branch
    %11 = sbr.rel (0) target = $region9
  $region8: #{sample_model_forward.5} parent=0 // pred_region
    _
  $region9: #{sample_model_forward.5} parent=0 // pred_fallthru
    _
  // Predicated region
  $region10: #{sample_model_forward.5} parent=0 // pred_check
    _
  $region11: #{sample_model_forward.5} parent=0 // pred_check_branch
    %13 = sbr.rel (0) target = $region13
  $region12: #{sample_model_forward.5} parent=0 // pred_region
    _
  $region13: #{sample_model_forward.5} parent=0 // pred_fallthru
    _
  %v14 = vld [vmem:[%s0] sm:$0xff]
  %v15 = vld [vmem:[%s0 + $0x8] sm:$0xff]
  %v16 = vld [vmem:[%s1] sm:$0x1]
  %v17 = vld [vmem:[%s2] sm:$0x1]
  %vm18 = vcmask 261120
  %v19 = vsel %vm18, %v14, 0.0
  %20 = vadd.xlane.f32.xlu0 %v19
  %v21 = vpop.xlane.xlu0 %20
  %v22 = vsel %vm18, %v15, 0.0
  %23 = vadd.xlane.f32.xlu0 %v22
  %v24 = vpop.xlane.xlu0 %23
  %v25 = vrcp.pop 32.0
  %v26 = vmul.f32 %v21, %v25
  %v27 = vmul.f32 %v24, %v25
  %v28 = vsub.f32 %v14, %v26
  %v29 = vsub.f32 %v15, %v27
  %v30 = vmul.f32 %v28, %v28
  %v31 = vmul.f32 %v29, %v29
  %v32 = vsel %vm18, %v30, 0.0
  %33 = vadd.xlane.f32.xlu0 %v32
  %v34 = vpop.xlane.xlu0 %33
  %v35 = vsel %vm18, %v31, 0.0
  %36 = vadd.xlane.f32.xlu0 %v35
  %v37 = vpop.xlane.xlu0 %36
  %v38 = vmul.f32 %v34, %v25
  %v39 = vmul.f32 %v37, %v25
  %v40 = vadd.f32 %v38, 1e-12
  %v41 = vadd.f32 %v39, 1e-12
  %v42 = vrsqrt.pop %v40
  %v43 = vrsqrt.pop %v41
  %v44 = vmul.f32 %v28, %v42
  %v45 = vmul.f32 %v29, %v43
  %v47 = vlaneseq
  %v48 = vshrl.u32 %v47, 7
  %v49 = vsub.s32 0, %v48
  %v50 = vrot.slane %v16, %v49
  %v52 = vmul.f32 %v44, %v50
  %v53 = vmul.f32 %v45, %v50
  %v55 = vlaneseq
  %v56 = vshrl.u32 %v55, 7
  %v57 = vsub.s32 0, %v56
  %v58 = vrot.slane %v17, %v57
  %v60 = vadd.f32 %v52, %v58
  %v61 = vadd.f32 %v53, %v58
  %v62 = vpack.c.bf16 %v61, %v60
  %v64 = vunpack.c.l.b16 %v62
  %v65 = vunpack.c.h.b16 %v62
  %v66 = vpack.c.b16 %v64, %v64
  %v67 = vpack.c.b16 %v65, %v65
  %vm70 = vcmask 257024
  %71 = vst.msk [vmem:[%s3] sm:$0xf] %vm70, %v66
  %72 = vst.msk [vmem:[%s3 + $0x4] sm:$0xf] %vm70, %v67
  // Predicated region
  $region14: #{sample_model_forward.5} parent=0 // pred_check
    _
  $region15: #{sample_model_forward.5} parent=0 // pred_check_branch
    %74 = sbr.rel (0) target = $region17
  $region16: #{sample_model_forward.5} parent=0 // pred_region
    _
  $region17: #{sample_model_forward.5} parent=0 // pred_fallthru
    _
  // Predicated region
  $region18: #{sample_model_forward.5} parent=0 // pred_check
    _
  $region19: #{sample_model_forward.5} parent=0 // pred_check_branch
    %76 = sbr.rel (0) target = $region21
  $region20: #{sample_model_forward.5} parent=0 // pred_region
    _
  $region21: #{sample_model_forward.5} parent=0 // pred_fallthru
    _

// kernel: sample_model_forward.7
$region0: #{sample_model_forward.7}
  #allocation0 [shape = 'u32[]', space=smem, size = 0x4, offset = 0x4, fixed_abs, tag = 'smem constant byte address 0x4 - core index']
  #allocation1 [shape = 'u32[144,128]{1,0:T(1,128)}', space=vmem, size = 0x12000, scoped, tag = 'internal scratch']
  %s0 = inlined_call_operand.vmem [shape: bf16[16,32], index: 0, kind: input, shape index: {}]
  %s1 = inlined_call_operand.vmem [shape: bf16[32,64], index: 1, kind: input, shape index: {}]
  %s2 = inlined_call_operand.vmem [shape: f32[1,64], index: 2, kind: input, shape index: {}]
  %s3 = inlined_call_operand.vmem [shape: bf16[64,32], index: 3, kind: input, shape index: {}]
  %s4 = inlined_call_operand.vmem [shape: f32[1,32], index: 4, kind: input, shape index: {}]
  %s5 = inlined_call_operand.vmem [shape: f32[1,32], index: 5, kind: input, shape index: {}]
  %s6 = inlined_call_operand.vmem [shape: f32[1,32], index: 6, kind: input, shape index: {}]
  %s7 = inlined_call_operand.vmem [shape: bf16[16,32], index: 7, kind: output, shape index: {}]
  %s8 = sld [smem:[#allocation0]]
  $region38: #{sample_model_forward.7} parent=0
    _
  %s10 = ssub.s32 1, %s8
  %s11 = scalar_select 0, %s10, %s8
  // Predicated region
  $region2: #{sample_model_forward.7} parent=0 // pred_check
    _
  $region3: #{sample_model_forward.7} parent=0 // pred_check_branch
    %13 = sbr.rel (0) target = $region5
  $region4: #{sample_model_forward.7} parent=0 // pred_region
    _
  $region5: #{sample_model_forward.7} parent=0 // pred_fallthru
    _
  // Predicated region
  $region6: #{sample_model_forward.7} parent=0 // pred_check
    _
  $region7: #{sample_model_forward.7} parent=0 // pred_check_branch
    %15 = sbr.rel (0) target = $region9
  $region8: #{sample_model_forward.7} parent=0 // pred_region
    _
  $region9: #{sample_model_forward.7} parent=0 // pred_fallthru
    _
  // Predicated region
  $region10: #{sample_model_forward.7} parent=0 // pred_check
    _
  $region11: #{sample_model_forward.7} parent=0 // pred_check_branch
    %17 = sbr.rel (0) target = $region13
  $region12: #{sample_model_forward.7} parent=0 // pred_region
    _
  $region13: #{sample_model_forward.7} parent=0 // pred_fallthru
    _
  // Predicated region
  $region14: #{sample_model_forward.7} parent=0 // pred_check
    _
  $region15: #{sample_model_forward.7} parent=0 // pred_check_branch
    %19 = sbr.rel (0) target = $region17
  $region16: #{sample_model_forward.7} parent=0 // pred_region
    _
  $region17: #{sample_model_forward.7} parent=0 // pred_fallthru
    _
  // Predicated region
  $region18: #{sample_model_forward.7} parent=0 // pred_check
    _
  $region19: #{sample_model_forward.7} parent=0 // pred_check_branch
    %21 = sbr.rel (0) target = $region21
  $region20: #{sample_model_forward.7} parent=0 // pred_region
    _
  $region21: #{sample_model_forward.7} parent=0 // pred_fallthru
    _
  // Predicated region
  $region22: #{sample_model_forward.7} parent=0 // pred_check
    _
  $region23: #{sample_model_forward.7} parent=0 // pred_check_branch
    %23 = sbr.rel (0) target = $region25
  $region24: #{sample_model_forward.7} parent=0 // pred_region
    _
  $region25: #{sample_model_forward.7} parent=0 // pred_fallthru
    _
  // Predicated region
  $region26: #{sample_model_forward.7} parent=0 // pred_check
    _
  $region27: #{sample_model_forward.7} parent=0 // pred_check_branch
    %25 = sbr.rel (0) target = $region29
  $region28: #{sample_model_forward.7} parent=0 // pred_region
    _
  $region29: #{sample_model_forward.7} parent=0 // pred_fallthru
    _
  %v27 = vld [vmem:[%s0] sm:$0xf]
  %v28 = vld [vmem:[%s0 + $0x4] sm:$0xf]
  %v29 = vld [vmem:[%s1] sm:$0xf]
  %v30 = vld [vmem:[%s1 + $0x4] sm:$0xf]
  %v31 = vld [vmem:[%s1 + $0x8] sm:$0xf]
  %v32 = vld [vmem:[%s1 + $0xc] sm:$0xf]
  %v33 = vld [vmem:[%s2] sm:$0x1]
  %v35 = vlaneseq
  %v36 = vshrl.u32 %v35, 7
  %v37 = vsub.s32 0, %v36
  %v38 = vrot.slane %v33, %v37
  %v42 = vunpack.c.l.b16 %v27
  %v43 = vunpack.c.l.b16 %v28
  %v44 = vpack.c.b16 %v43, %v42
  %v49 = vunpack.c.l.b16 %v29
  %v50 = vunpack.c.l.b16 %v30
  %v51 = vunpack.c.l.b16 %v31
  %v52 = vunpack.c.l.b16 %v32
  %v53 = vpack.c.b16 %v50, %v49
  %v54 = vpack.c.b16 %v52, %v51
  %vm57 = vcmask 261120
  %v59 = vsel %vm57, %v44, 0
  %61 = vmatprep.subr.bf16.mxu0 0
  %62 = vmatpush1.bf16.msra.mxu0 %v53
  %63 = vmatprep.subr.bf16.mxu0 0
  %64 = vmatpush1.bf16.msra.mxu0 %v54
  %65 = vmatprep.subr.bf16.mxu0 0
  %66 = vmatpush1.bf16.msra.mxu0 0
  %67 = vmatprep.subr.bf16.mxu0 0
  %68 = vmatpush1.bf16.msra.mxu0 0
  %69 = vmatprep.subr.bf16.mxu0 0
  %70 = vmatpush1.bf16.msra.mxu0 0
  %71 = vmatprep.subr.bf16.mxu0 0
  %72 = vmatpush1.bf16.msra.mxu0 0
  %73 = vmatprep.subr.bf16.mxu0 0
  %74 = vmatpush1.bf16.msra.mxu0 0
  %75 = vmatprep.subr.bf16.mxu0 0
  %76 = vmatpush1.bf16.msra.mxu0 0
  %77 = vmatprep.subr.bf16.mxu0 0
  %78 = vmatpush1.bf16.msra.mxu0 0
  %79 = vmatprep.subr.bf16.mxu0 0
  %80 = vmatpush1.bf16.msra.mxu0 0
  %81 = vmatprep.subr.bf16.mxu0 0
  %82 = vmatpush1.bf16.msra.mxu0 0
  %83 = vmatprep.subr.bf16.mxu0 0
  %84 = vmatpush1.bf16.msra.mxu0 0
  %85 = vmatprep.subr.bf16.mxu0 0
  %86 = vmatpush1.bf16.msra.mxu0 0
  %87 = vmatprep.subr.bf16.mxu0 0
  %88 = vmatpush1.bf16.msra.mxu0 0
  %89 = vmatprep.subr.bf16.mxu0 0
  %90 = vmatpush1.bf16.msra.mxu0 0
  %91 = vmatprep.subr.bf16.mxu0 0
  %92 = vmatpush1.bf16.msra.mxu0 0
  %93 = vmatprep.mubr.bf16.mxu0 0
  %94 = vmatmul.mubr.bf16.gmra.mrb[0].mxu0 %v59
  %v95 = vpop.f32.mrb[0].mxu0
  %v96 = vadd.f32 %v38, %v95
  %v97 = vpop.f32.mrb[0].mxu0
  %v98 = vpop.f32.mrb[0].mxu0
  %v99 = vadd.f32 %v38, %v98
  %v100 = vpop.f32.mrb[0].mxu0
  %101 = vdwg.mxu0
  %v102 = vmul.f32 %v96, 0.5
  %v103 = vmul.f32 %v99, 0.5
  %v104 = vmul.f32 %v96, 0.044715
  %v105 = vmul.f32 %v99, 0.044715
  %v106 = vmul.f32 %v104, %v96
  %v107 = vmul.f32 %v105, %v99
  %v108 = vmul.f32 %v106, %v96
  %v109 = vmul.f32 %v107, %v99
  %v110 = vadd.f32 %v96, %v108
  %v111 = vadd.f32 %v99, %v109
  %v112 = vmul.f32 %v110, 0.7978846
  %v113 = vmul.f32 %v111, 0.7978846
  %v114 = vtanh.pop %v112
  %v115 = vtanh.pop %v113
  %v116 = vadd.f32 %v114, 1.0
  %v117 = vadd.f32 %v115, 1.0
  %v118 = vmul.f32 %v102, %v116
  %v119 = vmul.f32 %v103, %v117
  %v120 = vpack.c.bf16 %v119, %v118
  %v121 = vld [vmem:[%s3] sm:$0xf]
  %v122 = vld [vmem:[%s3 + $0x4] sm:$0xf]
  %v123 = vld [vmem:[%s3 + $0x8] sm:$0xf]
  %v124 = vld [vmem:[%s3 + $0xc] sm:$0xf]
  %v125 = vld [vmem:[%s3 + $0x10] sm:$0xf]
  %v126 = vld [vmem:[%s3 + $0x14] sm:$0xf]
  %v127 = vld [vmem:[%s3 + $0x18] sm:$0xf]
  %v128 = vld [vmem:[%s3 + $0x1c] sm:$0xf]
  %v129 = vld [vmem:[%s4] sm:$0x1]
  %v131 = vlaneseq
  %v132 = vshrl.u32 %v131, 7
  %v133 = vsub.s32 0, %v132
  %v134 = vrot.slane %v129, %v133
  %v144 = vunpack.c.l.b16 %v121
  %v145 = vunpack.c.l.b16 %v122
  %v146 = vunpack.c.l.b16 %v123
  %v147 = vunpack.c.l.b16 %v124
  %v148 = vunpack.c.l.b16 %v125
  %v149 = vunpack.c.l.b16 %v126
  %v150 = vunpack.c.l.b16 %v127
  %v151 = vunpack.c.l.b16 %v128
  %v152 = vpack.c.b16 %v145, %v144
  %v153 = vpack.c.b16 %v147, %v146
  %v154 = vpack.c.b16 %v149, %v148
  %v155 = vpack.c.b16 %v151, %v150
  %vm160 = vcmask 523264
  %v162 = vsel %vm160, %v120, 0
  %164 = vmatprep.subr.bf16.mxu0 0
  %165 = vmatpush1.bf16.msra.mxu0 %v152
  %166 = vmatprep.subr.bf16.mxu0 0
  %167 = vmatpush1.bf16.msra.mxu0 %v153
  %168 = vmatprep.subr.bf16.mxu0 0
  %169 = vmatpush1.bf16.msra.mxu0 %v154
  %170 = vmatprep.subr.bf16.mxu0 0
  %171 = vmatpush1.bf16.msra.mxu0 %v155
  %172 = vmatprep.subr.bf16.mxu0 0
  %173 = vmatpush1.bf16.msra.mxu0 0
  %174 = vmatprep.subr.bf16.mxu0 0
  %175 = vmatpush1.bf16.msra.mxu0 0
  %176 = vmatprep.subr.bf16.mxu0 0
  %177 = vmatpush1.bf16.msra.mxu0 0
  %178 = vmatprep.subr.bf16.mxu0 0
  %179 = vmatpush1.bf16.msra.mxu0 0
  %180 = vmatprep.subr.bf16.mxu0 0
  %181 = vmatpush1.bf16.msra.mxu0 0
  %182 = vmatprep.subr.bf16.mxu0 0
  %183 = vmatpush1.bf16.msra.mxu0 0
  %184 = vmatprep.subr.bf16.mxu0 0
  %185 = vmatpush1.bf16.msra.mxu0 0
  %186 = vmatprep.subr.bf16.mxu0 0
  %187 = vmatpush1.bf16.msra.mxu0 0
  %188 = vmatprep.subr.bf16.mxu0 0
  %189 = vmatpush1.bf16.msra.mxu0 0
  %190 = vmatprep.subr.bf16.mxu0 0
  %191 = vmatpush1.bf16.msra.mxu0 0
  %192 = vmatprep.subr.bf16.mxu0 0
  %193 = vmatpush1.bf16.msra.mxu0 0
  %194 = vmatprep.subr.bf16.mxu0 0
  %195 = vmatpush1.bf16.msra.mxu0 0
  %196 = vmatprep.mubr.bf16.mxu0 0
  %197 = vmatmul.mubr.bf16.gmra.mrb[0].mxu0 %v162
  %v198 = vpop.f32.mrb[0].mxu0
  %v199 = vadd.f32 %v134, %v198
  %v200 = vpop.f32.mrb[0].mxu0
  %v201 = vpop.f32.mrb[0].mxu0
  %v202 = vadd.f32 %v134, %v201
  %v203 = vpop.f32.mrb[0].mxu0
  %204 = vdwg.mxu0
  %v205 = vunpack.c.l.bf16 %v27
  %v206 = vunpack.c.l.bf16 %v28
  %v207 = vadd.f32 %v205, %v199
  %v208 = vadd.f32 %v206, %v202
  %v209 = vld [vmem:[%s5] sm:$0x1]
  %v210 = vld [vmem:[%s6] sm:$0x1]
  %v211 = vsel %vm57, %v207, 0.0
  %212 = vadd.xlane.f32.xlu0 %v211
  %v213 = vpop.xlane.xlu0 %212
  %v214 = vsel %vm57, %v208, 0.0
  %215 = vadd.xlane.f32.xlu0 %v214
  %v216 = vpop.xlane.xlu0 %215
  %v217 = vrcp.pop 32.0
  %v218 = vmul.f32 %v213, %v217
  %v219 = vmul.f32 %v216, %v217
  %v220 = vsub.f32 %v207, %v218
  %v221 = vsub.f32 %v208, %v219
  %v222 = vmul.f32 %v220, %v220
  %v223 = vmul.f32 %v221, %v221
  %v224 = vsel %vm57, %v222, 0.0
  %225 = vadd.xlane.f32.xlu0 %v224
  %v226 = vpop.xlane.xlu0 %225
  %v227 = vsel %vm57, %v223, 0.0
  %228 = vadd.xlane.f32.xlu0 %v227
  %v229 = vpop.xlane.xlu0 %228
  %v230 = vmul.f32 %v226, %v217
  %v231 = vmul.f32 %v229, %v217
  %v232 = vadd.f32 %v230, 1e-12
  %v233 = vadd.f32 %v231, 1e-12
  %v234 = vrsqrt.pop %v232
  %v235 = vrsqrt.pop %v233
  %v236 = vmul.f32 %v220, %v234
  %v237 = vmul.f32 %v221, %v235
  %v239 = vlaneseq
  %v240 = vshrl.u32 %v239, 7
  %v241 = vsub.s32 0, %v240
  %v242 = vrot.slane %v209, %v241
  %v244 = vmul.f32 %v236, %v242
  %v245 = vmul.f32 %v237, %v242
  %v247 = vlaneseq
  %v248 = vshrl.u32 %v247, 7
  %v249 = vsub.s32 0, %v248
  %v250 = vrot.slane %v210, %v249
  %v252 = vadd.f32 %v244, %v250
  %v253 = vadd.f32 %v245, %v250
  %v254 = vpack.c.bf16 %v253, %v252
  %v256 = vunpack.c.l.b16 %v254
  %v257 = vunpack.c.h.b16 %v254
  %v258 = vpack.c.b16 %v256, %v256
  %v259 = vpack.c.b16 %v257, %v257
  %vm262 = vcmask 257024
  %263 = vst.msk [vmem:[%s7] sm:$0xf] %vm262, %v258
  %264 = vst.msk [vmem:[%s7 + $0x4] sm:$0xf] %vm262, %v259
  // Predicated region
  $region30: #{sample_model_forward.7} parent=0 // pred_check
    _
  $region31: #{sample_model_forward.7} parent=0 // pred_check_branch
    %266 = sbr.rel (0) target = $region33
  $region32: #{sample_model_forward.7} parent=0 // pred_region
    _
  $region33: #{sample_model_forward.7} parent=0 // pred_fallthru
    _
  // Predicated region
  $region34: #{sample_model_forward.7} parent=0 // pred_check
    _
  $region35: #{sample_model_forward.7} parent=0 // pred_check_branch
    %268 = sbr.rel (0) target = $region37
  $region36: #{sample_model_forward.7} parent=0 // pred_region
    _
  $region37: #{sample_model_forward.7} parent=0 // pred_fallthru
    _

// kernel: sample_model_forward.6
$region0: #{sample_model_forward.6}
  #allocation0 [shape = 'u32[]', space=smem, size = 0x4, offset = 0x4, fixed_abs, tag = 'smem constant byte address 0x4 - core index']
  #allocation1 [shape = 'u32[144,128]{1,0:T(1,128)}', space=vmem, size = 0x12000, scoped, tag = 'internal scratch']
  %s0 = inlined_call_operand.vmem [shape: bf16[2,8,32], index: 0, kind: input, shape index: {}]
  %s1 = inlined_call_operand.vmem [shape: bf16[32,96], index: 1, kind: input, shape index: {}]
  %s2 = inlined_call_operand.vmem [shape: f32[1,96], index: 2, kind: input, shape index: {}]
  %s3 = inlined_call_operand.vmem [shape: bf16[32,32], index: 3, kind: input, shape index: {}]
  %s4 = inlined_call_operand.vmem [shape: f32[1,32], index: 4, kind: input, shape index: {}]
  %s5 = inlined_call_operand.vmem [shape: f32[1,32], index: 5, kind: input, shape index: {}]
  %s6 = inlined_call_operand.vmem [shape: f32[1,32], index: 6, kind: input, shape index: {}]
  %s7 = inlined_call_operand.vmem [shape: f32[2,1,8], index: 7, kind: input, shape index: {}]
  %s8 = inlined_call_operand.vmem [shape: bf16[2,8,32], index: 8, kind: output, shape index: {}]
  %s9 = sld [smem:[#allocation0]]
  $region65: #{sample_model_forward.6} parent=0
    _
  %s11 = ssub.s32 1, %s9
  %s12 = scalar_select 0, %s11, %s9
  loop: start=0, step=1, limit=4
  $region2: #{sample_model_forward.6} parent=0 // loop_pre_header
    _
  $region3: #{sample_model_forward.6} parent=0 // loop_header
    %s14 = sphi 0, %s18
    %p15 = scmp.ge.s32.totalorder %s14, 4
    %s24 = sphi 0, %s26
    %s27 = sphi 0, %s24
    %s28 = sphi 0, %s27
    %s44 = sphi 0, %s28
    %s48 = sphi 0, %s48
    %s50 = sphi 0, %s48
    %s51 = sphi 0, %s50
    %s65 = sphi 0, %s51
    %s69 = sphi 0, %s69
    %s71 = sphi 0, %s69
    %s72 = sphi 0, %s71
    %s86 = sphi 0, %s72
    %s90 = sphi 0, %s90
    %s92 = sphi 0, %s90
    %s93 = sphi 0, %s92
    %s107 = sphi 0, %s93
    %s111 = sphi 0, %s111
    %s113 = sphi 0, %s111
    %s114 = sphi 0, %s113
    %s128 = sphi 0, %s114
    %s132 = sphi 0, %s132
    %s134 = sphi 0, %s132
    %s135 = sphi 0, %s134
    %s149 = sphi 0, %s135
    %s153 = sphi 0, %s153
    %s155 = sphi 0, %s153
    %s156 = sphi 0, %s155
    %s170 = sphi 0, %s156
    %s176 = sphi 0, %s178
    %s179 = sphi 0, %s176
    %s180 = sphi 0, %s179
    %s196 = sphi 0, %s180
    %s202 = sphi 0, %s204
    %s205 = sphi 0, %s202
    %s206 = sphi 0, %s205
    %s222 = sphi 0, %s206
  $region4: #{sample_model_forward.6} parent=0 // loop_header_branch
    %17 = sbr.rel (%p15) target = $region8
  $region5: #{sample_model_forward.6} parent=0 // loop_body
    %s19 = ssub.s32 %s14, 1
    %s20 = ssub.s32 %s14, 2
    %s21 = sadd.s32 %s14, 1
    %s22 = ssub.s32 %s14, %s21
    %p23 = scmp.eq.s32.totalorder %s22, 0
    %s25 = sadd.s32 %s24, 1
    %s26 = scalar_select %p23, %s24, %s25
    %p29 = pneg %p23
    %p30 = scmp.eq.s32.totalorder %s14, 1
    %p31 = por %p29, %p30
    %p32 = scmp.ne.s32.totalorder %s24, %s27
    %p33 = scmp.eq.s32.totalorder %s14, 0
    %p34 = por %p32, %p33
    %p35 = scmp.ne.s32.totalorder %s24, %s27
    %p36 = scmp.eq.s32.totalorder %s19, 1
    %p37 = por %p35, %p36
    %p38 = scmp.ne.s32.totalorder %s27, %s28
    %p39 = scmp.eq.s32.totalorder %s19, 0
    %p40 = por %p38, %p39
    %p41 = scmp.ne.s32.totalorder %s27, %s28
    %p42 = scmp.eq.s32.totalorder %s20, 1
    %p43 = por %p41, %p42
    %p45 = scmp.ne.s32.totalorder %s28, %s44
    %p46 = scmp.eq.s32.totalorder %s20, 0
    %p47 = por %p45, %p46
    %s49 = sadd.s32 %s48, 1
    %p52 = scmp.eq.s32.totalorder %s14, 1
    %p53 = scmp.ne.s32.totalorder %s48, %s50
    %p54 = scmp.eq.s32.totalorder %s14, 0
    %p55 = por %p53, %p54
    %p56 = scmp.ne.s32.totalorder %s48, %s50
    %p57 = scmp.eq.s32.totalorder %s19, 1
    %p58 = por %p56, %p57
    %p59 = scmp.ne.s32.totalorder %s50, %s51
    %p60 = scmp.eq.s32.totalorder %s19, 0
    %p61 = por %p59, %p60
    %p62 = scmp.ne.s32.totalorder %s50, %s51
    %p63 = scmp.eq.s32.totalorder %s20, 1
    %p64 = por %p62, %p63
    %p66 = scmp.ne.s32.totalorder %s51, %s65
    %p67 = scmp.eq.s32.totalorder %s20, 0
    %p68 = por %p66, %p67
    %s70 = sadd.s32 %s69, 1
    %p73 = scmp.eq.s32.totalorder %s14, 1
    %p74 = scmp.ne.s32.totalorder %s69, %s71
    %p75 = scmp.eq.s32.totalorder %s14, 0
    %p76 = por %p74, %p75
    %p77 = scmp.ne.s32.totalorder %s69, %s71
    %p78 = scmp.eq.s32.totalorder %s19, 1
    %p79 = por %p77, %p78
    %p80 = scmp.ne.s32.totalorder %s71, %s72
    %p81 = scmp.eq.s32.totalorder %s19, 0
    %p82 = por %p80, %p81
    %p83 = scmp.ne.s32.totalorder %s71, %s72
    %p84 = scmp.eq.s32.totalorder %s20, 1
    %p85 = por %p83, %p84
    %p87 = scmp.ne.s32.totalorder %s72, %s86
    %p88 = scmp.eq.s32.totalorder %s20, 0
    %p89 = por %p87, %p88
    %s91 = sadd.s32 %s90, 1
    %p94 = scmp.eq.s32.totalorder %s14, 1
    %p95 = scmp.ne.s32.totalorder %s90, %s92
    %p96 = scmp.eq.s32.totalorder %s14, 0
    %p97 = por %p95, %p96
    %p98 = scmp.ne.s32.totalorder %s90, %s92
    %p99 = scmp.eq.s32.totalorder %s19, 1
    %p100 = por %p98, %p99
    %p101 = scmp.ne.s32.totalorder %s92, %s93
    %p102 = scmp.eq.s32.totalorder %s19, 0
    %p103 = por %p101, %p102
    %p104 = scmp.ne.s32.totalorder %s92, %s93
    %p105 = scmp.eq.s32.totalorder %s20, 1
    %p106 = por %p104, %p105
    %p108 = scmp.ne.s32.totalorder %s93, %s107
    %p109 = scmp.eq.s32.totalorder %s20, 0
    %p110 = por %p108, %p109
    %s112 = sadd.s32 %s111, 1
    %p115 = scmp.eq.s32.totalorder %s14, 1
    %p116 = scmp.ne.s32.totalorder %s111, %s113
    %p117 = scmp.eq.s32.totalorder %s14, 0
    %p118 = por %p116, %p117
    %p119 = scmp.ne.s32.totalorder %s111, %s113
    %p120 = scmp.eq.s32.totalorder %s19, 1
    %p121 = por %p119, %p120
    %p122 = scmp.ne.s32.totalorder %s113, %s114
    %p123 = scmp.eq.s32.totalorder %s19, 0
    %p124 = por %p122, %p123
    %p125 = scmp.ne.s32.totalorder %s113, %s114
    %p126 = scmp.eq.s32.totalorder %s20, 1
    %p127 = por %p125, %p126
    %p129 = scmp.ne.s32.totalorder %s114, %s128
    %p130 = scmp.eq.s32.totalorder %s20, 0
    %p131 = por %p129, %p130
    %s133 = sadd.s32 %s132, 1
    %p136 = scmp.eq.s32.totalorder %s14, 1
    %p137 = scmp.ne.s32.totalorder %s132, %s134
    %p138 = scmp.eq.s32.totalorder %s14, 0
    %p139 = por %p137, %p138
    %p140 = scmp.ne.s32.totalorder %s132, %s134
    %p141 = scmp.eq.s32.totalorder %s19, 1
    %p142 = por %p140, %p141
    %p143 = scmp.ne.s32.totalorder %s134, %s135
    %p144 = scmp.eq.s32.totalorder %s19, 0
    %p145 = por %p143, %p144
    %p146 = scmp.ne.s32.totalorder %s134, %s135
    %p147 = scmp.eq.s32.totalorder %s20, 1
    %p148 = por %p146, %p147
    %p150 = scmp.ne.s32.totalorder %s135, %s149
    %p151 = scmp.eq.s32.totalorder %s20, 0
    %p152 = por %p150, %p151
    %s154 = sadd.s32 %s153, 1
    %p157 = scmp.eq.s32.totalorder %s14, 1
    %p158 = scmp.ne.s32.totalorder %s153, %s155
    %p159 = scmp.eq.s32.totalorder %s14, 0
    %p160 = por %p158, %p159
    %p161 = scmp.ne.s32.totalorder %s153, %s155
    %p162 = scmp.eq.s32.totalorder %s19, 1
    %p163 = por %p161, %p162
    %p164 = scmp.ne.s32.totalorder %s155, %s156
    %p165 = scmp.eq.s32.totalorder %s19, 0
    %p166 = por %p164, %p165
    %p167 = scmp.ne.s32.totalorder %s155, %s156
    %p168 = scmp.eq.s32.totalorder %s20, 1
    %p169 = por %p167, %p168
    %p171 = scmp.ne.s32.totalorder %s156, %s170
    %p172 = scmp.eq.s32.totalorder %s20, 0
    %p173 = por %p171, %p172
    %s174 = ssub.s32 %s14, %s21
    %p175 = scmp.eq.s32.totalorder %s174, 0
    %s177 = sadd.s32 %s176, 1
    %s178 = scalar_select %p175, %s176, %s177
    %p181 = pneg %p175
    %p182 = scmp.eq.s32.totalorder %s14, 1
    %p183 = por %p181, %p182
    %p184 = scmp.ne.s32.totalorder %s176, %s179
    %p185 = scmp.eq.s32.totalorder %s14, 0
    %p186 = por %p184, %p185
    %p187 = scmp.ne.s32.totalorder %s176, %s179
    %p188 = scmp.eq.s32.totalorder %s19, 1
    %p189 = por %p187, %p188
    %p190 = scmp.ne.s32.totalorder %s179, %s180
    %p191 = scmp.eq.s32.totalorder %s19, 0
    %p192 = por %p190, %p191
    %p193 = scmp.ne.s32.totalorder %s179, %s180
    %p194 = scmp.eq.s32.totalorder %s20, 1
    %p195 = por %p193, %p194
    %p197 = scmp.ne.s32.totalorder %s180, %s196
    %p198 = scmp.eq.s32.totalorder %s20, 0
    %p199 = por %p197, %p198
    %s200 = ssub.s32 %s14, %s21
    %p201 = scmp.eq.s32.totalorder %s200, 0
    %s203 = sadd.s32 %s202, 1
    %s204 = scalar_select %p201, %s202, %s203
    %p207 = pneg %p201
    %p208 = scmp.eq.s32.totalorder %s14, 1
    %p209 = por %p207, %p208
    %p210 = scmp.ne.s32.totalorder %s202, %s205
    %p211 = scmp.eq.s32.totalorder %s14, 0
    %p212 = por %p210, %p211
    %p213 = scmp.ne.s32.totalorder %s202, %s205
    %p214 = scmp.eq.s32.totalorder %s19, 1
    %p215 = por %p213, %p214
    %p216 = scmp.ne.s32.totalorder %s205, %s206
    %p217 = scmp.eq.s32.totalorder %s19, 0
    %p218 = por %p216, %p217
    %p219 = scmp.ne.s32.totalorder %s205, %s206
    %p220 = scmp.eq.s32.totalorder %s20, 1
    %p221 = por %p219, %p220
    %p223 = scmp.ne.s32.totalorder %s206, %s222
    %p224 = scmp.eq.s32.totalorder %s20, 0
    %p225 = por %p223, %p224
    %p226 = scmp.le.s32.totalorder 1, %s14
    %p227 = scmp.lt.s32.totalorder %s14, 3
    %p228 = pnand %p226, %p227
    %p229 = pneg %p228
    // Predicated region
    $region9: #{sample_model_forward.6} parent=5 // pred_check
      _
    $region10: #{sample_model_forward.6} parent=5 // pred_check_branch
      %231 = sbr.rel (%p228) target = $region12
    $region11: #{sample_model_forward.6} parent=5 // pred_region
      %s232 = ssub.s32 %s14, 1
      // Predicated region
      $region13: #{sample_model_forward.6} parent=11 // pred_check
        %p233 = pneg %p61
      $region14: #{sample_model_forward.6} parent=11 // pred_check_branch
        %235 = sbr.rel (%p233) target = $region16
      $region15: #{sample_model_forward.6} parent=11 // pred_region
        _
      $region16: #{sample_model_forward.6} parent=11 // pred_fallthru
        _
      // Predicated region
      $region17: #{sample_model_forward.6} parent=11 // pred_check
        %p236 = pneg %p82
      $region18: #{sample_model_forward.6} parent=11 // pred_check_branch
        %238 = sbr.rel (%p236) target = $region20
      $region19: #{sample_model_forward.6} parent=11 // pred_region
        _
      $region20: #{sample_model_forward.6} parent=11 // pred_fallthru
        _
      // Predicated region
      $region21: #{sample_model_forward.6} parent=11 // pred_check
        %p239 = pneg %p103
      $region22: #{sample_model_forward.6} parent=11 // pred_check_branch
        %241 = sbr.rel (%p239) target = $region24
      $region23: #{sample_model_forward.6} parent=11 // pred_region
        _
      $region24: #{sample_model_forward.6} parent=11 // pred_fallthru
        _
      // Predicated region
      $region25: #{sample_model_forward.6} parent=11 // pred_check
        %p242 = pneg %p124
      $region26: #{sample_model_forward.6} parent=11 // pred_check_branch
        %244 = sbr.rel (%p242) target = $region28
      $region27: #{sample_model_forward.6} parent=11 // pred_region
        _
      $region28: #{sample_model_forward.6} parent=11 // pred_fallthru
        _
      // Predicated region
      $region29: #{sample_model_forward.6} parent=11 // pred_check
        %p245 = pneg %p145
      $region30: #{sample_model_forward.6} parent=11 // pred_check_branch
        %247 = sbr.rel (%p245) target = $region32
      $region31: #{sample_model_forward.6} parent=11 // pred_region
        _
      $region32: #{sample_model_forward.6} parent=11 // pred_fallthru
        _
      // Predicated region
      $region33: #{sample_model_forward.6} parent=11 // pred_check
        %p248 = pneg %p166
      $region34: #{sample_model_forward.6} parent=11 // pred_check_branch
        %250 = sbr.rel (%p248) target = $region36
      $region35: #{sample_model_forward.6} parent=11 // pred_region
        _
      $region36: #{sample_model_forward.6} parent=11 // pred_fallthru
        _
    $region12: #{sample_model_forward.6} parent=5 // pred_fallthru
      _
    %p251 = scmp.lt.s32.totalorder %s14, 2
    // Predicated region
    $region37: #{sample_model_forward.6} parent=5 // pred_check
      %p252 = pneg %p251
    $region38: #{sample_model_forward.6} parent=5 // pred_check_branch
      %254 = sbr.rel (%p252) target = $region40
    $region39: #{sample_model_forward.6} parent=5 // pred_region
      // Predicated region
      $region41: #{sample_model_forward.6} parent=39 // pred_check
        %p255 = pneg %p34
      $region42: #{sample_model_forward.6} parent=39 // pred_check_branch
        %257 = sbr.rel (%p255) target = $region44
      $region43: #{sample_model_forward.6} parent=39 // pred_region
        %p258 = scmp.lt.s32.totalorder %s14, 1
        %s259 = scalar_select %p258, %s14, 1
        %s260 = smul.addr %s259, 4
        %s261 = scalar_lea.vmem %s0, %s260
      $region44: #{sample_model_forward.6} parent=39 // pred_fallthru
        _
      // Predicated region
      $region45: #{sample_model_forward.6} parent=39 // pred_check
        %p262 = pneg %p186
      $region46: #{sample_model_forward.6} parent=39 // pred_check_branch
        %264 = sbr.rel (%p262) target = $region48
      $region47: #{sample_model_forward.6} parent=39 // pred_region
        %p265 = scmp.lt.s32.totalorder %s14, 1
        %s266 = scalar_select %p265, %s14, 1
        %s267 = scalar_lea.vmem %s7, %s266
      $region48: #{sample_model_forward.6} parent=39 // pred_fallthru
        _
    $region40: #{sample_model_forward.6} parent=5 // pred_fallthru
      _
    %p268 = scmp.le.s32.totalorder 1, %s14
    %p269 = scmp.lt.s32.totalorder %s14, 3
    %p270 = pnand %p268, %p269
    %p271 = pneg %p270
    // Predicated region
    $region49: #{sample_model_forward.6} parent=5 // pred_check
      _
    $region50: #{sample_model_forward.6} parent=5 // pred_check_branch
      %273 = sbr.rel (%p270) target = $region52
    $region51: #{sample_model_forward.6} parent=5 // pred_region
      %s274 = ssub.s32 %s14, 1
      %p275 = scmp.lt.s32.totalorder %s19, 1
      %s276 = scalar_select %p275, %s19, 1
      %s277 = smul.addr %s276, 4
      %s278 = scalar_lea.vmem %s0, %s277
      %p279 = pneg %p40
      %p280 = pneg %p37
      %p281 = pneg %p61
      %p282 = pneg %p58
      %p283 = pneg %p82
      %p284 = pneg %p79
      %p285 = pneg %p103
      %p286 = pneg %p100
      %p287 = pneg %p124
      %p288 = pneg %p121
      %p289 = pneg %p145
      %p290 = pneg %p142
      %p291 = pneg %p166
      %p292 = pneg %p163
      %p293 = scmp.lt.s32.totalorder %s19, 1
      %s294 = scalar_select %p293, %s19, 1
      %s295 = scalar_lea.vmem %s7, %s294
      %p296 = pneg %p192
      %p297 = pneg %p189
      %p298 = pneg %p218
      %p299 = pneg %p215
      %p300 = scmp.lt.s32.totalorder %s19, 1
      %s301 = scalar_select %p300, %s19, 1
      %s302 = smul.addr %s301, 4
      %s303 = scalar_lea.vmem %s8, %s302
      %p304 = scmp.lt.s32.totalorder %s19, 1
      %s305 = scalar_select %p304, %s19, 1
      %s306 = smul.addr %s305, 4
      %s307 = scalar_lea.vmem %s0, %s306
      %p308 = scmp.lt.s32.totalorder %s19, 1
      %s309 = scalar_select %p308, %s19, 1
      %s310 = scalar_lea.vmem %s7, %s309
      %p311 = scmp.lt.s32.totalorder %s19, 1
      %s312 = scalar_select %p311, %s19, 1
      %s313 = smul.addr %s312, 4
      %s314 = scalar_lea.vmem %s8, %s313
      %v316 = vld [vmem:[%s307] sm:$0xf]
      %v317 = vld [vmem:[%s1] sm:$0xf]
      %v318 = vld [vmem:[%s1 + $0x4] sm:$0xf]
      %v319 = vld [vmem:[%s1 + $0x8] sm:$0xf]
      %v320 = vld [vmem:[%s1 + $0xc] sm:$0xf]
      %v321 = vld [vmem:[%s2] sm:$0x1]
      %v323 = vlaneseq
      %v324 = vshrl.u32 %v323, 7
      %v325 = vsub.s32 0, %v324
      %v326 = vrot.slane %v321, %v325
      %v332 = vunpack.c.l.b16 %v317
      %v333 = vunpack.c.l.b16 %v318
      %v334 = vunpack.c.l.b16 %v319
      %v335 = vunpack.c.l.b16 %v320
      %v336 = vpack.c.b16 %v333, %v332
      %v337 = vpack.c.b16 %v335, %v334
      %vm340 = vcmask 261120
      %v342 = vsel %vm340, %v316, 0
      %344 = vmatprep.subr.bf16.mxu0 0
      %345 = vmatpush1.bf16.msra.mxu0 %v336
      %346 = vmatprep.subr.bf16.mxu0 0
      %347 = vmatpush1.bf16.msra.mxu0 %v337
      %348 = vmatprep.subr.bf16.mxu0 0
      %349 = vmatpush1.bf16.msra.mxu0 0
      %350 = vmatprep.subr.bf16.mxu0 0
      %351 = vmatpush1.bf16.msra.mxu0 0
      %352 = vmatprep.subr.bf16.mxu0 0
      %353 = vmatpush1.bf16.msra.mxu0 0
      %354 = vmatprep.subr.bf16.mxu0 0
      %355 = vmatpush1.bf16.msra.mxu0 0
      %356 = vmatprep.subr.bf16.mxu0 0
      %357 = vmatpush1.bf16.msra.mxu0 0
      %358 = vmatprep.subr.bf16.mxu0 0
      %359 = vmatpush1.bf16.msra.mxu0 0
      %360 = vmatprep.subr.bf16.mxu0 0
      %361 = vmatpush1.bf16.msra.mxu0 0
      %362 = vmatprep.subr.bf16.mxu0 0
      %363 = vmatpush1.bf16.msra.mxu0 0
      %364 = vmatprep.subr.bf16.mxu0 0
      %365 = vmatpush1.bf16.msra.mxu0 0
      %366 = vmatprep.subr.bf16.mxu0 0
      %367 = vmatpush1.bf16.msra.mxu0 0
      %368 = vmatprep.subr.bf16.mxu0 0
      %369 = vmatpush1.bf16.msra.mxu0 0
      %370 = vmatprep.subr.bf16.mxu0 0
      %371 = vmatpush1.bf16.msra.mxu0 0
      %372 = vmatprep.subr.bf16.mxu0 0
      %373 = vmatpush1.bf16.msra.mxu0 0
      %374 = vmatprep.subr.bf16.mxu0 0
      %375 = vmatpush1.bf16.msra.mxu0 0
      %376 = vmatprep.mubr.bf16.mxu0 0
      %377 = vmatmul.mubr.bf16.gmra.mrb[0].mxu0 %v342
      %v378 = vpop.f32.mrb[0].mxu0
      %v379 = vadd.f32 %v326, %v378
      %v380 = vpop.f32.mrb[0].mxu0
      %v381 = vpop.f32.mrb[0].mxu0
      %v382 = vpop.f32.mrb[0].mxu0
      %383 = vdwg.mxu0
      %v384 = vpack.c.bf16 %v379, %v379
      %v385 = vld [vmem:[%s310] sm:$0x1]
      %v386 = vld [vmem:[%s3] sm:$0xf]
      %v387 = vld [vmem:[%s3 + $0x4] sm:$0xf]
      %v388 = vld [vmem:[%s3 + $0x8] sm:$0xf]
      %v389 = vld [vmem:[%s3 + $0xc] sm:$0xf]
      %391 = vrot.lane.b32.xlu0 %v384, 96
      %v392 = vpop.permute.xlu0 %391
      %vm393 = vcmask 64512
      %v395 = vsel %vm393, %v384, 0
      %v398 = vsel %vm393, %v392, 0
      %400 = vmatprep.subr.bf16.mxu0 0
      %401 = vmatpush1.bf16.xpose.msra.mxu0 %v398
      %402 = vmatprep.subr.bf16.mxu0 0
      %403 = vmatpush1.bf16.xpose.msra.mxu0 0
      %404 = vmatprep.subr.bf16.mxu0 0
      %405 = vmatpush1.bf16.xpose.msra.mxu0 0
      %406 = vmatprep.subr.bf16.mxu0 0
      %407 = vmatpush1.bf16.xpose.msra.mxu0 0
      %408 = vmatprep.subr.bf16.mxu0 0
      %409 = vmatpush1.bf16.xpose.msra.mxu0 0
      %410 = vmatprep.subr.bf16.mxu0 0
      %411 = vmatpush1.bf16.xpose.msra.mxu0 0
      %412 = vmatprep.subr.bf16.mxu0 0
      %413 = vmatpush1.bf16.xpose.msra.mxu0 0
      %414 = vmatprep.subr.bf16.mxu0 0
      %415 = vmatpush1.bf16.xpose.msra.mxu0 0
      %416 = vmatprep.subr.bf16.mxu0 0
      %417 = vmatpush1.bf16.xpose.msra.mxu0 0
      %418 = vmatprep.subr.bf16.mxu0 0
      %419 = vmatpush1.bf16.xpose.msra.mxu0 0
      %420 = vmatprep.subr.bf16.mxu0 0
      %421 = vmatpush1.bf16.xpose.msra.mxu0 0
      %422 = vmatprep.subr.bf16.mxu0 0
      %423 = vmatpush1.bf16.xpose.msra.mxu0 0
      %424 = vmatprep.subr.bf16.mxu0 0
      %425 = vmatpush1.bf16.xpose.msra.mxu0 0
      %426 = vmatprep.subr.bf16.mxu0 0
      %427 = vmatpush1.bf16.xpose.msra.mxu0 0
      %428 = vmatprep.subr.bf16.mxu0 0
      %429 = vmatpush1.bf16.xpose.msra.mxu0 0
      %430 = vmatprep.subr.bf16.mxu0 0
      %431 = vmatpush1.bf16.xpose.msra.mxu0 0
      %432 = vmatprep.mubr.bf16.mxu0 0
      %433 = vmatmul.mubr.bf16.gmra.mrb[0].mxu0 %v395
      %v434 = vpop.f32.mrb[0].mxu0
      %v435 = vadd.f32 0.0, %v434
      %v436 = vpop.f32.mrb[0].mxu0
      %v437 = vpop.f32.mrb[0].mxu0
      %v438 = vpop.f32.mrb[0].mxu0
      %439 = vdwg.mxu0
      %v440 = vmul.f32 %v435, 0.35355338
      %v442 = vlaneseq
      %v443 = vshrl.u32 %v442, 7
      %v444 = vsub.s32 0, %v443
      %v445 = vrot.slane %v385, %v444
      %v447 = vadd.f32 %v440, %v445
      %v448 = vsel %vm393, %v447, -inf
      %449 = vmax.xlane.f32.xlu0 %v448
      %v450 = vpop.xlane.xlu0 %449
      %v451 = vsub.f32 %v447, %v450
      %v452 = vmul.f32 %v451, 1.442695
      %v453 = vpow.pop %v452
      %v454 = vsel %vm393, %v453, 0.0
      %455 = vadd.xlane.f32.xlu0 %v454
      %v456 = vpop.xlane.xlu0 %455
      %v457 = vrcp.pop %v456
      %v458 = vmul.f32 %v453, %v457
      %v459 = vpack.c.bf16 %v458, %v458
      %460 = vrot.lane.b32.xlu0 %v384, 64
      %v461 = vpop.permute.xlu0 %460
      %v463 = vsel %vm393, %v459, 0
      %vm465 = vcmask 1043456
      %v467 = vsel %vm465, %v461, 0
      %469 = vmatprep.subr.bf16.mxu0 0
      %470 = vmatpush1.bf16.msra.mxu0 %v467
      %471 = vmatprep.subr.bf16.mxu0 0
      %472 = vmatpush1.bf16.msra.mxu0 0
      %473 = vmatprep.subr.bf16.mxu0 0
      %474 = vmatpush1.bf16.msra.mxu0 0
      %475 = vmatprep.subr.bf16.mxu0 0
      %476 = vmatpush1.bf16.msra.mxu0 0
      %477 = vmatprep.subr.bf16.mxu0 0
      %478 = vmatpush1.bf16.msra.mxu0 0
      %479 = vmatprep.subr.bf16.mxu0 0
      %480 = vmatpush1.bf16.msra.mxu0 0
      %481 = vmatprep.subr.bf16.mxu0 0
      %482 = vmatpush1.bf16.msra.mxu0 0
      %483 = vmatprep.subr.bf16.mxu0 0
      %484 = vmatpush1.bf16.msra.mxu0 0
      %485 = vmatprep.subr.bf16.mxu0 0
      %486 = vmatpush1.bf16.msra.mxu0 0
      %487 = vmatprep.subr.bf16.mxu0 0
      %488 = vmatpush1.bf16.msra.mxu0 0
      %489 = vmatprep.subr.bf16.mxu0 0
      %490 = vmatpush1.bf16.msra.mxu0 0
      %491 = vmatprep.subr.bf16.mxu0 0
      %492 = vmatpush1.bf16.msra.mxu0 0
      %493 = vmatprep.subr.bf16.mxu0 0
      %494 = vmatpush1.bf16.msra.mxu0 0
      %495 = vmatprep.subr.bf16.mxu0 0
      %496 = vmatpush1.bf16.msra.mxu0 0
      %497 = vmatprep.subr.bf16.mxu0 0
      %498 = vmatpush1.bf16.msra.mxu0 0
      %499 = vmatprep.subr.bf16.mxu0 0
      %500 = vmatpush1.bf16.msra.mxu0 0
      %501 = vmatprep.mubr.bf16.mxu0 0
      %502 = vmatmul.mubr.bf16.gmra.mrb[0].mxu0 %v463
      %v503 = vpop.f32.mrb[0].mxu0
      %v504 = vadd.f32 0.0, %v503
      %v505 = vpop.f32.mrb[0].mxu0
      %v506 = vpop.f32.mrb[0].mxu0
      %v507 = vpop.f32.mrb[0].mxu0
      %508 = vdwg.mxu0
      %v509 = vpack.c.bf16 %v504, %v504
      %510 = vrot.lane.b32.xlu0 %v384, 120
      %v511 = vpop.permute.xlu0 %510
      %512 = vrot.lane.b32.xlu0 %v384, 88
      %v513 = vpop.permute.xlu0 %512
      %v515 = vsel %vm393, %v511, 0
      %v518 = vsel %vm393, %v513, 0
      %520 = vmatprep.subr.bf16.mxu0 0
      %521 = vmatpush1.bf16.xpose.msra.mxu0 %v518
      %522 = vmatprep.subr.bf16.mxu0 0
      %523 = vmatpush1.bf16.xpose.msra.mxu0 0
      %524 = vmatprep.subr.bf16.mxu0 0
      %525 = vmatpush1.bf16.xpose.msra.mxu0 0
      %526 = vmatprep.subr.bf16.mxu0 0
      %527 = vmatpush1.bf16.xpose.msra.mxu0 0
      %528 = vmatprep.subr.bf16.mxu0 0
      %529 = vmatpush1.bf16.xpose.msra.mxu0 0
      %530 = vmatprep.subr.bf16.mxu0 0
      %531 = vmatpush1.bf16.xpose.msra.mxu0 0
      %532 = vmatprep.subr.bf16.mxu0 0
      %533 = vmatpush1.bf16.xpose.msra.mxu0 0
      %534 = vmatprep.subr.bf16.mxu0 0
      %535 = vmatpush1.bf16.xpose.msra.mxu0 0
      %536 = vmatprep.subr.bf16.mxu0 0
      %537 = vmatpush1.bf16.xpose.msra.mxu0 0
      %538 = vmatprep.subr.bf16.mxu0 0
      %539 = vmatpush1.bf16.xpose.msra.mxu0 0
      %540 = vmatprep.subr.bf16.mxu0 0
      %541 = vmatpush1.bf16.xpose.msra.mxu0 0
      %542 = vmatprep.subr.bf16.mxu0 0
      %543 = vmatpush1.bf16.xpose.msra.mxu0 0
      %544 = vmatprep.subr.bf16.mxu0 0
      %545 = vmatpush1.bf16.xpose.msra.mxu0 0
      %546 = vmatprep.subr.bf16.mxu0 0
      %547 = vmatpush1.bf16.xpose.msra.mxu0 0
      %548 = vmatprep.subr.bf16.mxu0 0
      %549 = vmatpush1.bf16.xpose.msra.mxu0 0
      %550 = vmatprep.subr.bf16.mxu0 0
      %551 = vmatpush1.bf16.xpose.msra.mxu0 0
      %552 = vmatprep.mubr.bf16.mxu0 0
      %553 = vmatmul.mubr.bf16.gmra.mrb[0].mxu0 %v515
      %v554 = vpop.f32.mrb[0].mxu0
      %v555 = vadd.f32 0.0, %v554
      %v556 = vpop.f32.mrb[0].mxu0
      %v557 = vpop.f32.mrb[0].mxu0
      %v558 = vpop.f32.mrb[0].mxu0
      %559 = vdwg.mxu0
      %v560 = vmul.f32 %v555, 0.35355338
      %v561 = vadd.f32 %v560, %v445
      %v562 = vsel %vm393, %v561, -inf
      %563 = vmax.xlane.f32.xlu0 %v562
      %v564 = vpop.xlane.xlu0 %563
      %v565 = vsub.f32 %v561, %v564
      %v566 = vmul.f32 %v565, 1.442695
      %v567 = vpow.pop %v566
      %v568 = vsel %vm393, %v567, 0.0
      %569 = vadd.xlane.f32.xlu0 %v568
      %v570 = vpop.xlane.xlu0 %569
      %v571 = vrcp.pop %v570
      %v572 = vmul.f32 %v567, %v571
      %v573 = vpack.c.bf16 %v572, %v572
      %574 = vrot.lane.b32.xlu0 %v384, 56
      %v575 = vpop.permute.xlu0 %574
      %v577 = vsel %vm393, %v573, 0
      %v580 = vsel %vm465, %v575, 0
      %582 = vmatprep.subr.bf16.mxu0 0
      %583 = vmatpush1.bf16.msra.mxu0 %v580
      %584 = vmatprep.subr.bf16.mxu0 0
      %585 = vmatpush1.bf16.msra.mxu0 0
      %586 = vmatprep.subr.bf16.mxu0 0
      %587 = vmatpush1.bf16.msra.mxu0 0
      %588 = vmatprep.subr.bf16.mxu0 0
      %589 = vmatpush1.bf16.msra.mxu0 0
      %590 = vmatprep.subr.bf16.mxu0 0
      %591 = vmatpush1.bf16.msra.mxu0 0
      %592 = vmatprep.subr.bf16.mxu0 0
      %593 = vmatpush1.bf16.msra.mxu0 0
      %594 = vmatprep.subr.bf16.mxu0 0
      %595 = vmatpush1.bf16.msra.mxu0 0
      %596 = vmatprep.subr.bf16.mxu0 0
      %597 = vmatpush1.bf16.msra.mxu0 0
      %598 = vmatprep.subr.bf16.mxu0 0
      %599 = vmatpush1.bf16.msra.mxu0 0
      %600 = vmatprep.subr.bf16.mxu0 0
      %601 = vmatpush1.bf16.msra.mxu0 0
      %602 = vmatprep.subr.bf16.mxu0 0
      %603 = vmatpush1.bf16.msra.mxu0 0
      %604 = vmatprep.subr.bf16.mxu0 0
      %605 = vmatpush1.bf16.msra.mxu0 0
      %606 = vmatprep.subr.bf16.mxu0 0
      %607 = vmatpush1.bf16.msra.mxu0 0
      %608 = vmatprep.subr.bf16.mxu0 0
      %609 = vmatpush1.bf16.msra.mxu0 0
      %610 = vmatprep.subr.bf16.mxu0 0
      %611 = vmatpush1.bf16.msra.mxu0 0
      %612 = vmatprep.subr.bf16.mxu0 0
      %613 = vmatpush1.bf16.msra.mxu0 0
      %614 = vmatprep.mubr.bf16.mxu0 0
      %615 = vmatmul.mubr.bf16.gmra.mrb[0].mxu0 %v577
      %v616 = vpop.f32.mrb[0].mxu0
      %v617 = vadd.f32 0.0, %v616
      %v618 = vpop.f32.mrb[0].mxu0
      %v619 = vpop.f32.mrb[0].mxu0
      %v620 = vpop.f32.mrb[0].mxu0
      %621 = vdwg.mxu0
      %v622 = vpack.c.bf16 %v617, %v617
      %v624 = vsel %vm393, %v622, 0
      %v627 = vsel %vm465, %v387, 0
      %629 = vmatprep.subr.bf16.mxu0 0
      %630 = vmatpush1.bf16.msra.mxu0 %v627
      %631 = vmatprep.subr.bf16.mxu0 0
      %632 = vmatpush1.bf16.msra.mxu0 0
      %633 = vmatprep.subr.bf16.mxu0 0
      %634 = vmatpush1.bf16.msra.mxu0 0
      %635 = vmatprep.subr.bf16.mxu0 0
      %636 = vmatpush1.bf16.msra.mxu0 0
      %637 = vmatprep.subr.bf16.mxu0 0
      %638 = vmatpush1.bf16.msra.mxu0 0
      %639 = vmatprep.subr.bf16.mxu0 0
      %640 = vmatpush1.bf16.msra.mxu0 0
      %641 = vmatprep.subr.bf16.mxu0 0
      %642 = vmatpush1.bf16.msra.mxu0 0
      %643 = vmatprep.subr.bf16.mxu0 0
      %644 = vmatpush1.bf16.msra.mxu0 0
      %645 = vmatprep.subr.bf16.mxu0 0
      %646 = vmatpush1.bf16.msra.mxu0 0
      %647 = vmatprep.subr.bf16.mxu0 0
      %648 = vmatpush1.bf16.msra.mxu0 0
      %649 = vmatprep.subr.bf16.mxu0 0
      %650 = vmatpush1.bf16.msra.mxu0 0
      %651 = vmatprep.subr.bf16.mxu0 0
      %652 = vmatpush1.bf16.msra.mxu0 0
      %653 = vmatprep.subr.bf16.mxu0 0
      %654 = vmatpush1.bf16.msra.mxu0 0
      %655 = vmatprep.subr.bf16.mxu0 0
      %656 = vmatpush1.bf16.msra.mxu0 0
      %657 = vmatprep.subr.bf16.mxu0 0
      %658 = vmatpush1.bf16.msra.mxu0 0
      %659 = vmatprep.subr.bf16.mxu0 0
      %660 = vmatpush1.bf16.msra.mxu0 0
      %661 = vmatprep.mubr.bf16.mxu0 0
      %662 = vmatmul.mubr.bf16.gmra.mrb[0].mxu0 %v624
      %v663 = vpop.f32.mrb[0].mxu0
      %v664 = vadd.f32 0.0, %v663
      %v665 = vpop.f32.mrb[0].mxu0
      %v666 = vpop.f32.mrb[0].mxu0
      %v667 = vpop.f32.mrb[0].mxu0
      %668 = vdwg.mxu0
      %v670 = vsel %vm393, %v509, 0
      %v673 = vsel %vm465, %v386, 0
      %675 = vmatprep.subr.bf16.mxu0 0
      %676 = vmatpush1.bf16.msra.mxu0 %v673
      %677 = vmatprep.subr.bf16.mxu0 0
      %678 = vmatpush1.bf16.msra.mxu0 0
      %679 = vmatprep.subr.bf16.mxu0 0
      %680 = vmatpush1.bf16.msra.mxu0 0
      %681 = vmatprep.subr.bf16.mxu0 0
      %682 = vmatpush1.bf16.msra.mxu0 0
      %683 = vmatprep.subr.bf16.mxu0 0
      %684 = vmatpush1.bf16.msra.mxu0 0
      %685 = vmatprep.subr.bf16.mxu0 0
      %686 = vmatpush1.bf16.msra.mxu0 0
      %687 = vmatprep.subr.bf16.mxu0 0
      %688 = vmatpush1.bf16.msra.mxu0 0
      %689 = vmatprep.subr.bf16.mxu0 0
      %690 = vmatpush1.bf16.msra.mxu0 0
      %691 = vmatprep.subr.bf16.mxu0 0
      %692 = vmatpush1.bf16.msra.mxu0 0
      %693 = vmatprep.subr.bf16.mxu0 0
      %694 = vmatpush1.bf16.msra.mxu0 0
      %695 = vmatprep.subr.bf16.mxu0 0
      %696 = vmatpush1.bf16.msra.mxu0 0
      %697 = vmatprep.subr.bf16.mxu0 0
      %698 = vmatpush1.bf16.msra.mxu0 0
      %699 = vmatprep.subr.bf16.mxu0 0
      %700 = vmatpush1.bf16.msra.mxu0 0
      %701 = vmatprep.subr.bf16.mxu0 0
      %702 = vmatpush1.bf16.msra.mxu0 0
      %703 = vmatprep.subr.bf16.mxu0 0
      %704 = vmatpush1.bf16.msra.mxu0 0
      %705 = vmatprep.subr.bf16.mxu0 0
      %706 = vmatpush1.bf16.msra.mxu0 0
      %707 = vmatprep.mubr.bf16.mxu0 0
      %708 = vmatmul.mubr.bf16.gmra.mrb[0].mxu0 %v670
      %v709 = vpop.f32.mrb[0].mxu0
      %v710 = vadd.f32 %v664, %v709
      %v711 = vpop.f32.mrb[0].mxu0
      %v712 = vpop.f32.mrb[0].mxu0
      %v713 = vpop.f32.mrb[0].mxu0
      %714 = vdwg.mxu0
      %715 = vrot.lane.b32.xlu0 %v384, 112
      %v716 = vpop.permute.xlu0 %715
      %717 = vrot.lane.b32.xlu0 %v384, 80
      %v718 = vpop.permute.xlu0 %717
      %v720 = vsel %vm393, %v716, 0
      %v723 = vsel %vm393, %v718, 0
      %725 = vmatprep.subr.bf16.mxu0 0
      %726 = vmatpush1.bf16.xpose.msra.mxu0 %v723
      %727 = vmatprep.subr.bf16.mxu0 0
      %728 = vmatpush1.bf16.xpose.msra.mxu0 0
      %729 = vmatprep.subr.bf16.mxu0 0
      %730 = vmatpush1.bf16.xpose.msra.mxu0 0
      %731 = vmatprep.subr.bf16.mxu0 0
      %732 = vmatpush1.bf16.xpose.msra.mxu0 0
      %733 = vmatprep.subr.bf16.mxu0 0
      %734 = vmatpush1.bf16.xpose.msra.mxu0 0
      %735 = vmatprep.subr.bf16.mxu0 0
      %736 = vmatpush1.bf16.xpose.msra.mxu0 0
      %737 = vmatprep.subr.bf16.mxu0 0
      %738 = vmatpush1.bf16.xpose.msra.mxu0 0
      %739 = vmatprep.subr.bf16.mxu0 0
      %740 = vmatpush1.bf16.xpose.msra.mxu0 0
      %741 = vmatprep.subr.bf16.mxu0 0
      %742 = vmatpush1.bf16.xpose.msra.mxu0 0
      %743 = vmatprep.subr.bf16.mxu0 0
      %744 = vmatpush1.bf16.xpose.msra.mxu0 0
      %745 = vmatprep.subr.bf16.mxu0 0
      %746 = vmatpush1.bf16.xpose.msra.mxu0 0
      %747 = vmatprep.subr.bf16.mxu0 0
      %748 = vmatpush1.bf16.xpose.msra.mxu0 0
      %749 = vmatprep.subr.bf16.mxu0 0
      %750 = vmatpush1.bf16.xpose.msra.mxu0 0
      %751 = vmatprep.subr.bf16.mxu0 0
      %752 = vmatpush1.bf16.xpose.msra.mxu0 0
      %753 = vmatprep.subr.bf16.mxu0 0
      %754 = vmatpush1.bf16.xpose.msra.mxu0 0
      %755 = vmatprep.subr.bf16.mxu0 0
      %756 = vmatpush1.bf16.xpose.msra.mxu0 0
      %757 = vmatprep.mubr.bf16.mxu0 0
      %758 = vmatmul.mubr.bf16.gmra.mrb[0].mxu0 %v720
      %v759 = vpop.f32.mrb[0].mxu0
      %v760 = vadd.f32 0.0, %v759
      %v761 = vpop.f32.mrb[0].mxu0
      %v762 = vpop.f32.mrb[0].mxu0
      %v763 = vpop.f32.mrb[0].mxu0
      %764 = vdwg.mxu0
      %v765 = vmul.f32 %v760, 0.35355338
      %v766 = vadd.f32 %v765, %v445
      %v767 = vsel %vm393, %v766, -inf
      %768 = vmax.xlane.f32.xlu0 %v767
      %v769 = vpop.xlane.xlu0 %768
      %v770 = vsub.f32 %v766, %v769
      %v771 = vmul.f32 %v770, 1.442695
      %v772 = vpow.pop %v771
      %v773 = vsel %vm393, %v772, 0.0
      %774 = vadd.xlane.f32.xlu0 %v773
      %v775 = vpop.xlane.xlu0 %774
      %v776 = vrcp.pop %v775
      %v777 = vmul.f32 %v772, %v776
      %v778 = vpack.c.bf16 %v777, %v777
      %779 = vrot.lane.b32.xlu0 %v384, 48
      %v780 = vpop.permute.xlu0 %779
      %v782 = vsel %vm393, %v778, 0
      %v785 = vsel %vm465, %v780, 0
      %787 = vmatprep.subr.bf16.mxu0 0
      %788 = vmatpush1.bf16.msra.mxu0 %v785
      %789 = vmatprep.subr.bf16.mxu0 0
      %790 = vmatpush1.bf16.msra.mxu0 0
      %791 = vmatprep.subr.bf16.mxu0 0
      %792 = vmatpush1.bf16.msra.mxu0 0
      %793 = vmatprep.subr.bf16.mxu0 0
      %794 = vmatpush1.bf16.msra.mxu0 0
      %795 = vmatprep.subr.bf16.mxu0 0
      %796 = vmatpush1.bf16.msra.mxu0 0
      %797 = vmatprep.subr.bf16.mxu0 0
      %798 = vmatpush1.bf16.msra.mxu0 0
      %799 = vmatprep.subr.bf16.mxu0 0
      %800 = vmatpush1.bf16.msra.mxu0 0
      %801 = vmatprep.subr.bf16.mxu0 0
      %802 = vmatpush1.bf16.msra.mxu0 0
      %803 = vmatprep.subr.bf16.mxu0 0
      %804 = vmatpush1.bf16.msra.mxu0 0
      %805 = vmatprep.subr.bf16.mxu0 0
      %806 = vmatpush1.bf16.msra.mxu0 0
      %807 = vmatprep.subr.bf16.mxu0 0
      %808 = vmatpush1.bf16.msra.mxu0 0
      %809 = vmatprep.subr.bf16.mxu0 0
      %810 = vmatpush1.bf16.msra.mxu0 0
      %811 = vmatprep.subr.bf16.mxu0 0
      %812 = vmatpush1.bf16.msra.mxu0 0
      %813 = vmatprep.subr.bf16.mxu0 0
      %814 = vmatpush1.bf16.msra.mxu0 0
      %815 = vmatprep.subr.bf16.mxu0 0
      %816 = vmatpush1.bf16.msra.mxu0 0
      %817 = vmatprep.subr.bf16.mxu0 0
      %818 = vmatpush1.bf16.msra.mxu0 0
      %819 = vmatprep.mubr.bf16.mxu0 0
      %820 = vmatmul.mubr.bf16.gmra.mrb[0].mxu0 %v782
      %v821 = vpop.f32.mrb[0].mxu0
      %v822 = vadd.f32 0.0, %v821
      %v823 = vpop.f32.mrb[0].mxu0
      %v824 = vpop.f32.mrb[0].mxu0
      %v825 = vpop.f32.mrb[0].mxu0
      %826 = vdwg.mxu0
      %v827 = vpack.c.bf16 %v822, %v822
      %v829 = vsel %vm393, %v827, 0
      %v832 = vsel %vm465, %v388, 0
      %834 = vmatprep.subr.bf16.mxu0 0
      %835 = vmatpush1.bf16.msra.mxu0 %v832
      %836 = vmatprep.subr.bf16.mxu0 0
      %837 = vmatpush1.bf16.msra.mxu0 0
      %838 = vmatprep.subr.bf16.mxu0 0
      %839 = vmatpush1.bf16.msra.mxu0 0
      %840 = vmatprep.subr.bf16.mxu0 0
      %841 = vmatpush1.bf16.msra.mxu0 0
      %842 = vmatprep.subr.bf16.mxu0 0
      %843 = vmatpush1.bf16.msra.mxu0 0
      %844 = vmatprep.subr.bf16.mxu0 0
      %845 = vmatpush1.bf16.msra.mxu0 0
      %846 = vmatprep.subr.bf16.mxu0 0
      %847 = vmatpush1.bf16.msra.mxu0 0
      %848 = vmatprep.subr.bf16.mxu0 0
      %849 = vmatpush1.bf16.msra.mxu0 0
      %850 = vmatprep.subr.bf16.mxu0 0
      %851 = vmatpush1.bf16.msra.mxu0 0
      %852 = vmatprep.subr.bf16.mxu0 0
      %853 = vmatpush1.bf16.msra.mxu0 0
      %854 = vmatprep.subr.bf16.mxu0 0
      %855 = vmatpush1.bf16.msra.mxu0 0
      %856 = vmatprep.subr.bf16.mxu0 0
      %857 = vmatpush1.bf16.msra.mxu0 0
      %858 = vmatprep.subr.bf16.mxu0 0
      %859 = vmatpush1.bf16.msra.mxu0 0
      %860 = vmatprep.subr.bf16.mxu0 0
      %861 = vmatpush1.bf16.msra.mxu0 0
      %862 = vmatprep.subr.bf16.mxu0 0
      %863 = vmatpush1.bf16.msra.mxu0 0
      %864 = vmatprep.subr.bf16.mxu0 0
      %865 = vmatpush1.bf16.msra.mxu0 0
      %866 = vmatprep.mubr.bf16.mxu0 0
      %867 = vmatmul.mubr.bf16.gmra.mrb[0].mxu0 %v829
      %v868 = vpop.f32.mrb[0].mxu0
      %v869 = vadd.f32 0.0, %v868
      %v870 = vpop.f32.mrb[0].mxu0
      %v871 = vpop.f32.mrb[0].mxu0
      %v872 = vpop.f32.mrb[0].mxu0
      %873 = vdwg.mxu0
      %v874 = vadd.f32 %v710, %v869
      %875 = vrot.lane.b32.xlu0 %v384, 104
      %v876 = vpop.permute.xlu0 %875
      %877 = vrot.lane.b32.xlu0 %v384, 72
      %v878 = vpop.permute.xlu0 %877
      %v880 = vsel %vm393, %v876, 0
      %v883 = vsel %vm393, %v878, 0
      %885 = vmatprep.subr.bf16.mxu0 0
      %886 = vmatpush1.bf16.xpose.msra.mxu0 %v883
      %887 = vmatprep.subr.bf16.mxu0 0
      %888 = vmatpush1.bf16.xpose.msra.mxu0 0
      %889 = vmatprep.subr.bf16.mxu0 0
      %890 = vmatpush1.bf16.xpose.msra.mxu0 0
      %891 = vmatprep.subr.bf16.mxu0 0
      %892 = vmatpush1.bf16.xpose.msra.mxu0 0
      %893 = vmatprep.subr.bf16.mxu0 0
      %894 = vmatpush1.bf16.xpose.msra.mxu0 0
      %895 = vmatprep.subr.bf16.mxu0 0
      %896 = vmatpush1.bf16.xpose.msra.mxu0 0
      %897 = vmatprep.subr.bf16.mxu0 0
      %898 = vmatpush1.bf16.xpose.msra.mxu0 0
      %899 = vmatprep.subr.bf16.mxu0 0
      %900 = vmatpush1.bf16.xpose.msra.mxu0 0
      %901 = vmatprep.subr.bf16.mxu0 0
      %902 = vmatpush1.bf16.xpose.msra.mxu0 0
      %903 = vmatprep.subr.bf16.mxu0 0
      %904 = vmatpush1.bf16.xpose.msra.mxu0 0
      %905 = vmatprep.subr.bf16.mxu0 0
      %906 = vmatpush1.bf16.xpose.msra.mxu0 0
      %907 = vmatprep.subr.bf16.mxu0 0
      %908 = vmatpush1.bf16.xpose.msra.mxu0 0
      %909 = vmatprep.subr.bf16.mxu0 0
      %910 = vmatpush1.bf16.xpose.msra.mxu0 0
      %911 = vmatprep.subr.bf16.mxu0 0
      %912 = vmatpush1.bf16.xpose.msra.mxu0 0
      %913 = vmatprep.subr.bf16.mxu0 0
      %914 = vmatpush1.bf16.xpose.msra.mxu0 0
      %915 = vmatprep.subr.bf16.mxu0 0
      %916 = vmatpush1.bf16.xpose.msra.mxu0 0
      %917 = vmatprep.mubr.bf16.mxu0 0
      %918 = vmatmul.mubr.bf16.gmra.mrb[0].mxu0 %v880
      %v919 = vpop.f32.mrb[0].mxu0
      %v920 = vadd.f32 0.0, %v919
      %v921 = vpop.f32.mrb[0].mxu0
      %v922 = vpop.f32.mrb[0].mxu0
      %v923 = vpop.f32.mrb[0].mxu0
      %924 = vdwg.mxu0
      %v925 = vmul.f32 %v920, 0.35355338
      %v926 = vadd.f32 %v925, %v445
      %v927 = vsel %vm393, %v926, -inf
      %928 = vmax.xlane.f32.xlu0 %v927
      %v929 = vpop.xlane.xlu0 %928
      %v930 = vsub.f32 %v926, %v929
      %v931 = vmul.f32 %v930, 1.442695
      %v932 = vpow.pop %v931
      %v933 = vsel %vm393, %v932, 0.0
      %934 = vadd.xlane.f32.xlu0 %v933
      %v935 = vpop.xlane.xlu0 %934
      %v936 = vrcp.pop %v935
      %v937 = vmul.f32 %v932, %v936
      %v938 = vpack.c.bf16 %v937, %v937
      %939 = vrot.lane.b32.xlu0 %v384, 40
      %v940 = vpop.permute.xlu0 %939
      %v942 = vsel %vm393, %v938, 0
      %v945 = vsel %vm465, %v940, 0
      %947 = vmatprep.subr.bf16.mxu0 0
      %948 = vmatpush1.bf16.msra.mxu0 %v945
      %949 = vmatprep.subr.bf16.mxu0 0
      %950 = vmatpush1.bf16.msra.mxu0 0
      %951 = vmatprep.subr.bf16.mxu0 0
      %952 = vmatpush1.bf16.msra.mxu0 0
      %953 = vmatprep.subr.bf16.mxu0 0
      %954 = vmatpush1.bf16.msra.mxu0 0
      %955 = vmatprep.subr.bf16.mxu0 0
      %956 = vmatpush1.bf16.msra.mxu0 0
      %957 = vmatprep.subr.bf16.mxu0 0
      %958 = vmatpush1.bf16.msra.mxu0 0
      %959 = vmatprep.subr.bf16.mxu0 0
      %960 = vmatpush1.bf16.msra.mxu0 0
      %961 = vmatprep.subr.bf16.mxu0 0
      %962 = vmatpush1.bf16.msra.mxu0 0
      %963 = vmatprep.subr.bf16.mxu0 0
      %964 = vmatpush1.bf16.msra.mxu0 0
      %965 = vmatprep.subr.bf16.mxu0 0
      %966 = vmatpush1.bf16.msra.mxu0 0
      %967 = vmatprep.subr.bf16.mxu0 0
      %968 = vmatpush1.bf16.msra.mxu0 0
      %969 = vmatprep.subr.bf16.mxu0 0
      %970 = vmatpush1.bf16.msra.mxu0 0
      %971 = vmatprep.subr.bf16.mxu0 0
      %972 = vmatpush1.bf16.msra.mxu0 0
      %973 = vmatprep.subr.bf16.mxu0 0
      %974 = vmatpush1.bf16.msra.mxu0 0
      %975 = vmatprep.subr.bf16.mxu0 0
      %976 = vmatpush1.bf16.msra.mxu0 0
      %977 = vmatprep.subr.bf16.mxu0 0
      %978 = vmatpush1.bf16.msra.mxu0 0
      %979 = vmatprep.mubr.bf16.mxu0 0
      %980 = vmatmul.mubr.bf16.gmra.mrb[0].mxu0 %v942
      %v981 = vpop.f32.mrb[0].mxu0
      %v982 = vadd.f32 0.0, %v981
      %v983 = vpop.f32.mrb[0].mxu0
      %v984 = vpop.f32.mrb[0].mxu0
      %v985 = vpop.f32.mrb[0].mxu0
      %986 = vdwg.mxu0
      %v987 = vpack.c.bf16 %v982, %v982
      %v989 = vsel %vm393, %v987, 0
      %v992 = vsel %vm465, %v389, 0
      %994 = vmatprep.subr.bf16.mxu0 0
      %995 = vmatpush1.bf16.msra.mxu0 %v992
      %996 = vmatprep.subr.bf16.mxu0 0
      %997 = vmatpush1.bf16.msra.mxu0 0
      %998 = vmatprep.subr.bf16.mxu0 0
      %999 = vmatpush1.bf16.msra.mxu0 0
      %1000 = vmatprep.subr.bf16.mxu0 0
      %1001 = vmatpush1.bf16.msra.mxu0 0
      %1002 = vmatprep.subr.bf16.mxu0 0
      %1003 = vmatpush1.bf16.msra.mxu0 0
      %1004 = vmatprep.subr.bf16.mxu0 0
      %1005 = vmatpush1.bf16.msra.mxu0 0
      %1006 = vmatprep.subr.bf16.mxu0 0
      %1007 = vmatpush1.bf16.msra.mxu0 0
      %1008 = vmatprep.subr.bf16.mxu0 0
      %1009 = vmatpush1.bf16.msra.mxu0 0
      %1010 = vmatprep.subr.bf16.mxu0 0
      %1011 = vmatpush1.bf16.msra.mxu0 0
      %1012 = vmatprep.subr.bf16.mxu0 0
      %1013 = vmatpush1.bf16.msra.mxu0 0
      %1014 = vmatprep.subr.bf16.mxu0 0
      %1015 = vmatpush1.bf16.msra.mxu0 0
      %1016 = vmatprep.subr.bf16.mxu0 0
      %1017 = vmatpush1.bf16.msra.mxu0 0
      %1018 = vmatprep.subr.bf16.mxu0 0
      %1019 = vmatpush1.bf16.msra.mxu0 0
      %1020 = vmatprep.subr.bf16.mxu0 0
      %1021 = vmatpush1.bf16.msra.mxu0 0
      %1022 = vmatprep.subr.bf16.mxu0 0
      %1023 = vmatpush1.bf16.msra.mxu0 0
      %1024 = vmatprep.subr.bf16.mxu0 0
      %1025 = vmatpush1.bf16.msra.mxu0 0
      %1026 = vmatprep.mubr.bf16.mxu0 0
      %1027 = vmatmul.mubr.bf16.gmra.mrb[0].mxu0 %v989
      %v1028 = vpop.f32.mrb[0].mxu0
      %v1029 = vadd.f32 0.0, %v1028
      %v1030 = vpop.f32.mrb[0].mxu0
      %v1031 = vpop.f32.mrb[0].mxu0
      %v1032 = vpop.f32.mrb[0].mxu0
      %1033 = vdwg.mxu0
      %v1034 = vadd.f32 %v874, %v1029
      %v1035 = vunpack.c.l.bf16 %v316
      %v1036 = vadd.f32 %v1035, %v1034
      %v1037 = vld [vmem:[%s4] sm:$0x1]
      %v1039 = vlaneseq
      %v1040 = vshrl.u32 %v1039, 7
      %v1041 = vsub.s32 0, %v1040
      %v1042 = vrot.slane %v1037, %v1041
      %v1044 = vadd.f32 %v1036, %v1042
      %v1045 = vld [vmem:[%s5] sm:$0x1]
      %v1046 = vld [vmem:[%s6] sm:$0x1]
      %v1047 = vsel %vm340, %v1044, 0.0
      %1048 = vadd.xlane.f32.xlu0 %v1047
      %v1049 = vpop.xlane.xlu0 %1048
      %v1050 = vrcp.pop 32.0
      %v1051 = vmul.f32 %v1049, %v1050
      %v1052 = vsub.f32 %v1044, %v1051
      %v1053 = vmul.f32 %v1052, %v1052
      %v1054 = vsel %vm340, %v1053, 0.0
      %1055 = vadd.xlane.f32.xlu0 %v1054
      %v1056 = vpop.xlane.xlu0 %1055
      %v1057 = vmul.f32 %v1056, %v1050
      %v1058 = vadd.f32 %v1057, 1e-12
      %v1059 = vrsqrt.pop %v1058
      %v1060 = vmul.f32 %v1052, %v1059
      %v1062 = vlaneseq
      %v1063 = vshrl.u32 %v1062, 7
      %v1064 = vsub.s32 0, %v1063
      %v1065 = vrot.slane %v1045, %v1064
      %v1067 = vmul.f32 %v1060, %v1065
      %v1069 = vlaneseq
      %v1070 = vshrl.u32 %v1069, 7
      %v1071 = vsub.s32 0, %v1070
      %v1072 = vrot.slane %v1046, %v1071
      %v1074 = vadd.f32 %v1067, %v1072
      %v1075 = vpack.c.bf16 %v1074, %v1074
      %vm1076 = vcmask 257024
      %1077 = vst.msk [vmem:[%s314] sm:$0xf] %vm1076, %v1075
      %p1078 = scmp.lt.s32.totalorder %s19, 1
      %s1079 = scalar_select %p1078, %s19, 1
      %s1080 = smul.addr %s1079, 4
      %s1081 = scalar_lea.vmem %s8, %s1080
      // Predicated region
      $region53: #{sample_model_forward.6} parent=51 // pred_check
        %p1082 = pneg %p215
      $region54: #{sample_model_forward.6} parent=51 // pred_check_branch
        %1084 = sbr.rel (%p1082) target = $region56
      $region55: #{sample_model_forward.6} parent=51 // pred_region
        _
      $region56: #{sample_model_forward.6} parent=51 // pred_fallthru
        _
    $region52: #{sample_model_forward.6} parent=5 // pred_fallthru
      _
    %p1085 = scmp.le.s32.totalorder 2, %s14
    // Predicated region
    $region57: #{sample_model_forward.6} parent=5 // pred_check
      %p1086 = pneg %p1085
    $region58: #{sample_model_forward.6} parent=5 // pred_check_branch
      %1088 = sbr.rel (%p1086) target = $region60
    $region59: #{sample_model_forward.6} parent=5 // pred_region
      %s1089 = ssub.s32 %s14, 2
      // Predicated region
      $region61: #{sample_model_forward.6} parent=59 // pred_check
        %p1090 = pneg %p221
      $region62: #{sample_model_forward.6} parent=59 // pred_check_branch
        %1092 = sbr.rel (%p1090) target = $region64
      $region63: #{sample_model_forward.6} parent=59 // pred_region
        %p1093 = scmp.lt.s32.totalorder %s20, 1
        %s1094 = scalar_select %p1093, %s20, 1
        %s1095 = smul.addr %s1094, 4
        %s1096 = scalar_lea.vmem %s8, %s1095
      $region64: #{sample_model_forward.6} parent=59 // pred_fallthru
        _
    $region60: #{sample_model_forward.6} parent=5 // pred_fallthru
      _
  $region6: #{sample_model_forward.6} parent=0 // loop_footer
    %s18 = sadd.s32 1, %s14
  $region7: #{sample_model_forward.6} parent=0 // loop_footer_branch
    %13 = sbr.rel target = $region3
  $region8: #{sample_model_forward.6} parent=0 // loop_exit
    _

</llo_original>
